<compile_context>
chip_gen: v7x
topology: tpu7x:2x2x1
jax: 0.10.0
libtpu: 0.0.40
codegen_flags: <defaults>
</compile_context>

<pallas_src>
import jax
import jax.numpy as jnp
from jax.experimental import pallas as pl
from jax.experimental.pallas import tpu as pltpu


# MXU-operand dtype. bf16 operands + f32 accumulation (recommended for
# v6e/v7x, fine on v5e MXU). Elementwise math stays f32 everywhere.
_MXU_DTYPE = jnp.bfloat16


def _round_up(x, m):
    return ((x + m - 1) // m) * m


# ----------------------------- fused Pallas kernel ---------------------------


def _make_kernel(cc, cs, cp, hw):
    """Kernel factory; cc/cs/cp/hw are static Python ints (closed over)."""

    def kernel(x_ref, wenc_ref, wgb_ref, wout_ref, b_ref, img_ref, con_ref):
        # x_ref:    (2, cp, hw)              MXU dtype   [xa ; xb]
        # wenc_ref: (2, cc+cs, cp)           MXU dtype   [wc ; ws] per generator
        # wgb_ref:  (2, 2*cc, cs)            f32         [wg ; wb] per generator
        # wout_ref: (2, cp, cc)              MXU dtype
        # b_ref:    (2, cc+cs+2*cc+cp, 1)    f32         [bc;bs;bg;bb;bout]
        # img_ref:  (2, cp, 2*hw)            f32  out    [x_ba|x_a_rec], [x_ab|x_b_rec]
        # con_ref:  (2, cc, 2*hw)            f32  out    [c_a|c_a_rec], [c_b|c_b_rec]
        f32 = jnp.float32

        def load_gen(g):
            w_enc = wenc_ref[g]
            w_gb = wgb_ref[g]
            w_out = wout_ref[g]
            b = b_ref[g]
            b_enc = b[: cc + cs]
            b_gb = b[cc + cs: cc + cs + 2 * cc]
            b_out = b[cc + cs + 2 * cc:]
            return w_enc, w_gb, w_out, b_enc, b_gb, b_out

        wenc_a, wgb_a, wout_a, benc_a, bgb_a, bout_a = load_gen(0)
        wenc_b, wgb_b, wout_b, benc_b, bgb_b, bout_b = load_gen(1)

        def encode(x, w_enc, b_enc):
            """Fused content+style encoder: one MXU dot, split rows after."""
            e = jnp.dot(w_enc, x.astype(w_enc.dtype),
                        preferred_element_type=f32) + b_enc          # (cc+cs, hw)
            c = jnp.maximum(e[:cc], 0.0)                             # content
            # mean over lanes == GAP then linear (bias is lane-constant)
            s = jnp.tanh(jnp.mean(e[cc:], axis=-1, keepdims=True))   # (cs, 1)
            return c, s

        def encode_content(x, w_enc, b_enc):
            """Second-stage encode: only the content rows are needed."""
            e = jnp.dot(w_enc, x.astype(w_enc.dtype),
                        preferred_element_type=f32)
            return jnp.maximum(e[:cc] + b_enc[:cc], 0.0)             # (cc, hw)

        def gamma_beta(s, w_gb, b_gb):
            gb = jnp.dot(w_gb, s, preferred_element_type=f32) + b_gb  # (2cc, 1)
            return gb[:cc], gb[cc:]

        def out_conv(h, w_out, b_out):
            return jnp.tanh(
                jnp.dot(w_out, h.astype(w_out.dtype),
                        preferred_element_type=f32) + b_out)

        xa = x_ref[0]
        xb = x_ref[1]

        # ---- first-stage encodes ----
        c_a, s_a = encode(xa, wenc_a, benc_a)                        # gen_a.encode(x_a)
        c_b, s_b = encode(xb, wenc_b, benc_b)                        # gen_b.encode(x_b)

        # ---- gamma/beta hoisted (shared by both decodes of each generator) ----
        gam_a, bet_a = gamma_beta(s_a, wgb_a, bgb_a)
        gam_b, bet_b = gamma_beta(s_b, wgb_b, bgb_b)

        # ---- decodes, lane-concatenated per generator (one 512-lane matmul each) ----
        # gen_a.decode: x_ba = dec_a(c_b, s_a), x_a_recon = dec_a(c_a, s_a)
        h_a = jnp.maximum(gam_a * jnp.concatenate([c_b, c_a], axis=-1) + bet_a, 0.0)
        img_a = out_conv(h_a, wout_a, bout_a)                        # [x_ba | x_a_recon]
        # gen_b.decode: x_ab = dec_b(c_a, s_b), x_b_recon = dec_b(c_b, s_b)
        h_b = jnp.maximum(gam_b * jnp.concatenate([c_a, c_b], axis=-1) + bet_b, 0.0)
        img_b = out_conv(h_b, wout_b, bout_b)                        # [x_ab | x_b_recon]

        # ---- second-stage (content-only) encodes of the cross-domain images ----
        c_b_rec = encode_content(img_a[:, :hw], wenc_a, benc_a)      # gen_a.encode(x_ba)
        c_a_rec = encode_content(img_b[:, :hw], wenc_b, benc_b)      # gen_b.encode(x_ab)

        # ---- lane-dense packed stores (2 wide slabs instead of 8 narrow ones) ----
        img_ref[0] = img_a
        img_ref[1] = img_b
        con_ref[0] = jnp.concatenate([c_a, c_a_rec], axis=-1)
        con_ref[1] = jnp.concatenate([c_b, c_b_rec], axis=-1)

    return kernel


# ------------------------------ host-side packing -----------------------------


def _pack_generator(p, cp, mxu_dtype):
    """Pack one generator's params into (w_enc, w_gb, w_out, b_all)."""
    cin = p["wc"].shape[1]
    pad_in = cp - cin
    w_enc = jnp.pad(jnp.concatenate([p["wc"], p["ws"]], axis=0),
                    ((0, 0), (0, pad_in))).astype(mxu_dtype)          # (cc+cs, cp)
    w_gb = jnp.concatenate([p["wg"], p["wb"]], axis=0).astype(jnp.float32)  # (2cc, cs)
    w_out = jnp.pad(p["wout"], ((0, pad_in), (0, 0))).astype(mxu_dtype)     # (cp, cc)
    b_all = jnp.concatenate(
        [p["bc"], p["bs"], p["bg"], p["bb"], jnp.pad(p["bout"], (0, pad_in))]
    ).astype(jnp.float32)[:, None]                                    # (cc+cs+2cc+cp, 1)
    return w_enc, w_gb, w_out, b_all


# --------------------------------- wrapper -----------------------------------


@jax.jit
def trans_net_forward(x_a, x_b, params_a, params_b):
    """Mirrors Trans_Net.forward.  x_a: (N, Ca, H, W), x_b: (N, Cb, H, W)."""
    n, ca, h, w = x_a.shape
    _, cb, _, _ = x_b.shape
    hw = h * w

    cc = params_a["wc"].shape[0]
    cs = params_a["ws"].shape[0]
    assert cc % 8 == 0 and cs % 8 == 0, "content/style dims must be 8-aligned"
    assert params_b["wc"].shape[0] == cc and params_b["ws"].shape[0] == cs
    cp = _round_up(max(ca, cb), 8)        # common padded channel count

    # One input slab (N, 2, Cp, HW); x only feeds MXU dots so MXU dtype is fine.
    def prep(x, c):
        return jnp.pad(x.reshape(n, c, hw), ((0, 0), (0, cp - c), (0, 0)))

    x_in = jnp.stack([prep(x_a, ca), prep(x_b, cb)], axis=1).astype(_MXU_DTYPE)

    packed_a = _pack_generator(params_a, cp, _MXU_DTYPE)
    packed_b = _pack_generator(params_b, cp, _MXU_DTYPE)
    w_enc, w_gb, w_out, b_all = [jnp.stack([a, b]) for a, b in zip(packed_a, packed_b)]
    btot = b_all.shape[1]

    kernel = _make_kernel(cc, cs, cp, hw)

    img, con = pl.pallas_call(
        kernel,
        grid=(n,),
        in_specs=[
            pl.BlockSpec((None, 2, cp, hw), lambda i: (i, 0, 0, 0)),
            pl.BlockSpec((2, cc + cs, cp), lambda i: (0, 0, 0)),
            pl.BlockSpec((2, 2 * cc, cs), lambda i: (0, 0, 0)),
            pl.BlockSpec((2, cp, cc), lambda i: (0, 0, 0)),
            pl.BlockSpec((2, btot, 1), lambda i: (0, 0, 0)),
        ],
        out_specs=[
            pl.BlockSpec((None, 2, cp, 2 * hw), lambda i: (i, 0, 0, 0)),
            pl.BlockSpec((None, 2, cc, 2 * hw), lambda i: (i, 0, 0, 0)),
        ],
        out_shape=[
            jax.ShapeDtypeStruct((n, 2, cp, 2 * hw), jnp.float32),
            jax.ShapeDtypeStruct((n, 2, cc, 2 * hw), jnp.float32),
        ],
        compiler_params=pltpu.CompilerParams(
            dimension_semantics=("parallel",)),
    )(x_in, w_enc, w_gb, w_out, b_all)

    # Slice the packed slabs back into the 8 named outputs (trim channel pad).
    def img_out(slot, lane0, c):
        return img[:, slot, :c, lane0:lane0 + hw].reshape(n, c, h, w)

    def con_out(slot, lane0):
        return con[:, slot, :, lane0:lane0 + hw].reshape(n, cc, h, w)

    return {
        "x_ba": img_out(0, 0, ca),
        "x_ab": img_out(1, 0, cb),
        "x_a_recon": img_out(0, hw, ca),
        "x_b_recon": img_out(1, hw, cb),
        "c_a": con_out(0, 0),
        "c_b": con_out(1, 0),
        "c_a_recon": con_out(0, hw),
        "c_b_recon": con_out(1, hw),
    }


# --------------------------- parameter creation -------------------------------


def make_generator_params(key, in_channels, content_dim, style_dim):
    """Natural-orientation (out, in) weights; packing/padding happens in the wrapper."""
    k = jax.random.split(key, 5)
    scale = 0.1
    return {
        # content encoder (1x1 conv)
        "wc": scale * jax.random.normal(k[0], (content_dim, in_channels), jnp.float32),
        "bc": jnp.zeros((content_dim,), jnp.float32),
        # style encoder (linear after global average pool)
        "ws": scale * jax.random.normal(k[1], (style_dim, in_channels), jnp.float32),
        "bs": jnp.zeros((style_dim,), jnp.float32),
        # decoder: style -> gamma / beta
        "wg": scale * jax.random.normal(k[2], (content_dim, style_dim), jnp.float32),
        "bg": jnp.ones((content_dim,), jnp.float32),
        "wb": scale * jax.random.normal(k[3], (content_dim, style_dim), jnp.float32),
        "bb": jnp.ones((content_dim,), jnp.float32),
        # decoder: output 1x1 conv
        "wout": scale * jax.random.normal(k[4], (in_channels, content_dim), jnp.float32),
        "bout": jnp.zeros((in_channels,), jnp.float32),
    }


# --------------------------- pure-JAX reference (f32) -------------------------


def trans_net_forward_ref(x_a, x_b, pa, pb):
    n, ca, h, w = x_a.shape
    cb = x_b.shape[1]

    def enc(x, p):
        c_in = x.shape[1]
        xm = x.reshape(x.shape[0], c_in, -1)
        cont = jnp.maximum(
            jnp.einsum("oc,ncl->nol", p["wc"], xm) + p["bc"][None, :, None], 0.0)
        s = jnp.tanh(jnp.einsum("oc,nc->no", p["ws"], xm.mean(-1)) + p["bs"][None, :])
        return cont, s

    def dec(cont, s, p):
        gamma = jnp.einsum("os,ns->no", p["wg"], s) + p["bg"][None, :]
        beta = jnp.einsum("os,ns->no", p["wb"], s) + p["bb"][None, :]
        hmap = jnp.maximum(gamma[:, :, None] * cont + beta[:, :, None], 0.0)
        return jnp.tanh(jnp.einsum("oc,ncl->nol", p["wout"], hmap)
                        + p["bout"][None, :, None])

    c_a, s_a = enc(x_a, pa)
    c_b, s_b = enc(x_b, pb)
    x_ba = dec(c_b, s_a, pa).reshape(n, ca, h, w)
    x_ab = dec(c_a, s_b, pb).reshape(n, cb, h, w)
    x_ar = dec(c_a, s_a, pa).reshape(n, ca, h, w)
    x_br = dec(c_b, s_b, pb).reshape(n, cb, h, w)
    c_br, _ = enc(x_ba, pa)
    c_ar, _ = enc(x_ab, pb)
    cc = pa["wc"].shape[0]
    cm = lambda c: c.reshape(n, cc, h, w)
    return {"x_ba": x_ba, "x_ab": x_ab, "x_a_recon": x_ar, "x_b_recon": x_br,
            "c_a": cm(c_a), "c_b": cm(c_b),
            "c_a_recon": cm(c_ar), "c_b_recon": cm(c_br)}


# ---------------------------------- main --------------------------------------

if __name__ == "__main__":
    key = jax.random.PRNGKey(0)
    k_xa, k_xb, k_pa, k_pb = jax.random.split(key, 4)

    N, Ca, Cb, H, W = 2, 4, 3, 16, 16
    CONTENT_DIM, STYLE_DIM = 8, 8

    x_a = jax.random.normal(k_xa, (N, Ca, H, W), jnp.float32)
    x_b = jax.random.normal(k_xb, (N, Cb, H, W), jnp.float32)

    params_a = make_generator_params(k_pa, Ca, CONTENT_DIM, STYLE_DIM)
    params_b = make_generator_params(k_pb, Cb, CONTENT_DIM, STYLE_DIM)

    out = trans_net_forward(x_a, x_b, params_a, params_b)
    jax.block_until_ready(out)

    # shape checks (NCHW conventions of the PyTorch module)
    assert out["x_ba"].shape == (N, Ca, H, W)
    assert out["x_ab"].shape == (N, Cb, H, W)
    assert out["x_a_recon"].shape == (N, Ca, H, W)
    assert out["x_b_recon"].shape == (N, Cb, H, W)
    assert out["c_a"].shape == (N, CONTENT_DIM, H, W)
    assert out["c_b"].shape == (N, CONTENT_DIM, H, W)
    assert out["c_a_recon"].shape == (N, CONTENT_DIM, H, W)
    assert out["c_b_recon"].shape == (N, CONTENT_DIM, H, W)

    # numerical check vs. pure-JAX f32 reference (loose tol for bf16 MXU operands)
    ref = trans_net_forward_ref(x_a, x_b, params_a, params_b)
    for name in out:
        err = float(jnp.max(jnp.abs(out[name] - ref[name])))
        assert err < 5e-2, f"{name}: max abs err {err}"

    print("KERNEL_OK")
</pallas_src>

<mosaic_0001>
module attributes {stable_mosaic.version = 11 : i64} {
  func.func @kernel(%arg0: i32, %arg1: memref<1x2x8x256xbf16, #tpu.memory_space<vmem>>, %arg2: memref<2x16x8xbf16, #tpu.memory_space<vmem>>, %arg3: memref<2x16x8xf32, #tpu.memory_space<vmem>>, %arg4: memref<2x8x8xbf16, #tpu.memory_space<vmem>>, %arg5: memref<2x40x1xf32, #tpu.memory_space<vmem>>, %arg6: memref<1x2x8x512xf32, #tpu.memory_space<vmem>>, %arg7: memref<1x2x8x512xf32, #tpu.memory_space<vmem>>) attributes {dimension_semantics = [#tpu.dimension_semantics<parallel>], iteration_bounds = array<i64: 2>, scalar_prefetch = 0 : i64, scratch_operands = 0 : i64, tpu.core_type = #tpu.core_type<tc>, window_params = [{transform_indices = @transform_0, window_bounds = array<i64: 1, 2, 8, 256>}, {pipeline_mode = #tpu.pipeline_mode<synchronous>, transform_indices = @transform_1, window_bounds = array<i64: 2, 16, 8>}, {pipeline_mode = #tpu.pipeline_mode<synchronous>, transform_indices = @transform_2, window_bounds = array<i64: 2, 16, 8>}, {pipeline_mode = #tpu.pipeline_mode<synchronous>, transform_indices = @transform_3, window_bounds = array<i64: 2, 8, 8>}, {pipeline_mode = #tpu.pipeline_mode<synchronous>, transform_indices = @transform_4, window_bounds = array<i64: 2, 40, 1>}, {transform_indices = @transform_5, window_bounds = array<i64: 1, 2, 8, 512>}, {transform_indices = @transform_6, window_bounds = array<i64: 1, 2, 8, 512>}]} {
    %c0 = arith.constant 0 : index
    %c0_0 = arith.constant 0 : index
    %c0_1 = arith.constant 0 : index
    %0 = vector.load %arg2[%c0, %c0_0, %c0_1] : memref<2x16x8xbf16, #tpu.memory_space<vmem>>, vector<1x16x8xbf16>
    %1 = vector.shape_cast %0 : vector<1x16x8xbf16> to vector<16x8xbf16>
    %c0_2 = arith.constant 0 : index
    %c0_3 = arith.constant 0 : index
    %c0_4 = arith.constant 0 : index
    %2 = vector.load %arg3[%c0_2, %c0_3, %c0_4] : memref<2x16x8xf32, #tpu.memory_space<vmem>>, vector<1x16x8xf32>
    %3 = vector.shape_cast %2 : vector<1x16x8xf32> to vector<16x8xf32>
    %c0_5 = arith.constant 0 : index
    %c0_6 = arith.constant 0 : index
    %c0_7 = arith.constant 0 : index
    %4 = vector.load %arg4[%c0_5, %c0_6, %c0_7] : memref<2x8x8xbf16, #tpu.memory_space<vmem>>, vector<1x8x8xbf16>
    %5 = vector.shape_cast %4 : vector<1x8x8xbf16> to vector<8x8xbf16>
    %c0_8 = arith.constant 0 : index
    %c0_9 = arith.constant 0 : index
    %c0_10 = arith.constant 0 : index
    %6 = vector.load %arg5[%c0_8, %c0_9, %c0_10] : memref<2x40x1xf32, #tpu.memory_space<vmem>>, vector<1x40x1xf32>
    %7 = vector.shape_cast %6 : vector<1x40x1xf32> to vector<40x1xf32>
    %8 = vector.extract_strided_slice %7 {offsets = [0, 0], sizes = [16, 1], strides = [1, 1]} : vector<40x1xf32> to vector<16x1xf32>
    %9 = vector.extract_strided_slice %7 {offsets = [16, 0], sizes = [16, 1], strides = [1, 1]} : vector<40x1xf32> to vector<16x1xf32>
    %10 = vector.extract_strided_slice %7 {offsets = [32, 0], sizes = [8, 1], strides = [1, 1]} : vector<40x1xf32> to vector<8x1xf32>
    %c1 = arith.constant 1 : index
    %c0_11 = arith.constant 0 : index
    %c0_12 = arith.constant 0 : index
    %11 = vector.load %arg2[%c1, %c0_11, %c0_12] : memref<2x16x8xbf16, #tpu.memory_space<vmem>>, vector<1x16x8xbf16>
    %12 = vector.shape_cast %11 : vector<1x16x8xbf16> to vector<16x8xbf16>
    %c1_13 = arith.constant 1 : index
    %c0_14 = arith.constant 0 : index
    %c0_15 = arith.constant 0 : index
    %13 = vector.load %arg3[%c1_13, %c0_14, %c0_15] : memref<2x16x8xf32, #tpu.memory_space<vmem>>, vector<1x16x8xf32>
    %14 = vector.shape_cast %13 : vector<1x16x8xf32> to vector<16x8xf32>
    %c1_16 = arith.constant 1 : index
    %c0_17 = arith.constant 0 : index
    %c0_18 = arith.constant 0 : index
    %15 = vector.load %arg4[%c1_16, %c0_17, %c0_18] : memref<2x8x8xbf16, #tpu.memory_space<vmem>>, vector<1x8x8xbf16>
    %16 = vector.shape_cast %15 : vector<1x8x8xbf16> to vector<8x8xbf16>
    %c1_19 = arith.constant 1 : index
    %c0_20 = arith.constant 0 : index
    %c0_21 = arith.constant 0 : index
    %17 = vector.load %arg5[%c1_19, %c0_20, %c0_21] : memref<2x40x1xf32, #tpu.memory_space<vmem>>, vector<1x40x1xf32>
    %18 = vector.shape_cast %17 : vector<1x40x1xf32> to vector<40x1xf32>
    %19 = vector.extract_strided_slice %18 {offsets = [0, 0], sizes = [16, 1], strides = [1, 1]} : vector<40x1xf32> to vector<16x1xf32>
    %20 = vector.extract_strided_slice %18 {offsets = [16, 0], sizes = [16, 1], strides = [1, 1]} : vector<40x1xf32> to vector<16x1xf32>
    %21 = vector.extract_strided_slice %18 {offsets = [32, 0], sizes = [8, 1], strides = [1, 1]} : vector<40x1xf32> to vector<8x1xf32>
    %c0_22 = arith.constant 0 : index
    %c0_23 = arith.constant 0 : index
    %c0_24 = arith.constant 0 : index
    %c0_25 = arith.constant 0 : index
    %22 = vector.load %arg1[%c0_22, %c0_23, %c0_24, %c0_25] : memref<1x2x8x256xbf16, #tpu.memory_space<vmem>>, vector<1x1x8x256xbf16>
    %23 = vector.shape_cast %22 : vector<1x1x8x256xbf16> to vector<8x256xbf16>
    %c0_26 = arith.constant 0 : index
    %c1_27 = arith.constant 1 : index
    %c0_28 = arith.constant 0 : index
    %c0_29 = arith.constant 0 : index
    %24 = vector.load %arg1[%c0_26, %c1_27, %c0_28, %c0_29] : memref<1x2x8x256xbf16, #tpu.memory_space<vmem>>, vector<1x1x8x256xbf16>
    %25 = vector.shape_cast %24 : vector<1x1x8x256xbf16> to vector<8x256xbf16>
    %cst = arith.constant dense<0.000000e+00> : vector<16x256xf32>
    %26 = tpu.matmul %1, %23, %cst {dimension_numbers = #tpu.dot_dimension_numbers<[1], [0], [0], [1], [0, 0, 1, 1], [], []>} : vector<16x8xbf16>, vector<8x256xbf16>, vector<16x256xf32> -> vector<16x256xf32>
    %27 = vector.broadcast %8 : vector<16x1xf32> to vector<16x256xf32>
    %28 = arith.addf %26, %27 : vector<16x256xf32>
    %29 = vector.extract_strided_slice %28 {offsets = [0, 0], sizes = [8, 256], strides = [1, 1]} : vector<16x256xf32> to vector<8x256xf32>
    %cst_30 = arith.constant 0.000000e+00 : f32
    %30 = vector.broadcast %cst_30 : f32 to vector<8x256xf32>
    %31 = arith.maximumf %29, %30 : vector<8x256xf32>
    %32 = vector.extract_strided_slice %28 {offsets = [8, 0], sizes = [8, 256], strides = [1, 1]} : vector<16x256xf32> to vector<8x256xf32>
    %cst_31 = arith.constant dense<0.000000e+00> : vector<8xf32>
    %33 = vector.multi_reduction <add>, %32, %cst_31 [1] : vector<8x256xf32> to vector<8xf32>
    %34 = vector.shape_cast %33 : vector<8xf32> to vector<8x1xf32>
    %cst_32 = arith.constant 2.560000e+02 : f32
    %35 = vector.broadcast %cst_32 : f32 to vector<8x1xf32>
    %36 = arith.divf %34, %35 : vector<8x1xf32>
    %37 = math.tanh %36 : vector<8x1xf32>
    %cst_33 = arith.constant dense<0.000000e+00> : vector<16x256xf32>
    %38 = tpu.matmul %12, %25, %cst_33 {dimension_numbers = #tpu.dot_dimension_numbers<[1], [0], [0], [1], [0, 0, 1, 1], [], []>} : vector<16x8xbf16>, vector<8x256xbf16>, vector<16x256xf32> -> vector<16x256xf32>
    %39 = vector.broadcast %19 : vector<16x1xf32> to vector<16x256xf32>
    %40 = arith.addf %38, %39 : vector<16x256xf32>
    %41 = vector.extract_strided_slice %40 {offsets = [0, 0], sizes = [8, 256], strides = [1, 1]} : vector<16x256xf32> to vector<8x256xf32>
    %cst_34 = arith.constant 0.000000e+00 : f32
    %42 = vector.broadcast %cst_34 : f32 to vector<8x256xf32>
    %43 = arith.maximumf %41, %42 : vector<8x256xf32>
    %44 = vector.extract_strided_slice %40 {offsets = [8, 0], sizes = [8, 256], strides = [1, 1]} : vector<16x256xf32> to vector<8x256xf32>
    %cst_35 = arith.constant dense<0.000000e+00> : vector<8xf32>
    %45 = vector.multi_reduction <add>, %44, %cst_35 [1] : vector<8x256xf32> to vector<8xf32>
    %46 = vector.shape_cast %45 : vector<8xf32> to vector<8x1xf32>
    %cst_36 = arith.constant 2.560000e+02 : f32
    %47 = vector.broadcast %cst_36 : f32 to vector<8x1xf32>
    %48 = arith.divf %46, %47 : vector<8x1xf32>
    %49 = math.tanh %48 : vector<8x1xf32>
    %cst_37 = arith.constant dense<0.000000e+00> : vector<16x1xf32>
    %50 = tpu.matmul %3, %37, %cst_37 {dimension_numbers = #tpu.dot_dimension_numbers<[1], [0], [0], [1], [0, 0, 1, 1], [], []>} : vector<16x8xf32>, vector<8x1xf32>, vector<16x1xf32> -> vector<16x1xf32>
    %51 = arith.addf %50, %9 : vector<16x1xf32>
    %52 = vector.extract_strided_slice %51 {offsets = [0, 0], sizes = [8, 1], strides = [1, 1]} : vector<16x1xf32> to vector<8x1xf32>
    %53 = vector.extract_strided_slice %51 {offsets = [8, 0], sizes = [8, 1], strides = [1, 1]} : vector<16x1xf32> to vector<8x1xf32>
    %cst_38 = arith.constant dense<0.000000e+00> : vector<16x1xf32>
    %54 = tpu.matmul %14, %49, %cst_38 {dimension_numbers = #tpu.dot_dimension_numbers<[1], [0], [0], [1], [0, 0, 1, 1], [], []>} : vector<16x8xf32>, vector<8x1xf32>, vector<16x1xf32> -> vector<16x1xf32>
    %55 = arith.addf %54, %20 : vector<16x1xf32>
    %56 = vector.extract_strided_slice %55 {offsets = [0, 0], sizes = [8, 1], strides = [1, 1]} : vector<16x1xf32> to vector<8x1xf32>
    %57 = vector.extract_strided_slice %55 {offsets = [8, 0], sizes = [8, 1], strides = [1, 1]} : vector<16x1xf32> to vector<8x1xf32>
    %58 = tpu.concatenate %43, %31 in 1 : vector<8x256xf32>, vector<8x256xf32> -> vector<8x512xf32>
    %59 = vector.broadcast %52 : vector<8x1xf32> to vector<8x512xf32>
    %60 = arith.mulf %59, %58 : vector<8x512xf32>
    %61 = vector.broadcast %53 : vector<8x1xf32> to vector<8x512xf32>
    %62 = arith.addf %60, %61 : vector<8x512xf32>
    %cst_39 = arith.constant 0.000000e+00 : f32
    %63 = vector.broadcast %cst_39 : f32 to vector<8x512xf32>
    %64 = arith.maximumf %62, %63 : vector<8x512xf32>
    %65 = arith.truncf %64 : vector<8x512xf32> to vector<8x512xbf16>
    %cst_40 = arith.constant dense<0.000000e+00> : vector<8x512xf32>
    %66 = tpu.matmul %5, %65, %cst_40 {dimension_numbers = #tpu.dot_dimension_numbers<[1], [0], [0], [1], [0, 0, 1, 1], [], []>} : vector<8x8xbf16>, vector<8x512xbf16>, vector<8x512xf32> -> vector<8x512xf32>
    %67 = vector.broadcast %10 : vector<8x1xf32> to vector<8x512xf32>
    %68 = arith.addf %66, %67 : vector<8x512xf32>
    %69 = math.tanh %68 : vector<8x512xf32>
    %70 = tpu.concatenate %31, %43 in 1 : vector<8x256xf32>, vector<8x256xf32> -> vector<8x512xf32>
    %71 = vector.broadcast %56 : vector<8x1xf32> to vector<8x512xf32>
    %72 = arith.mulf %71, %70 : vector<8x512xf32>
    %73 = vector.broadcast %57 : vector<8x1xf32> to vector<8x512xf32>
    %74 = arith.addf %72, %73 : vector<8x512xf32>
    %cst_41 = arith.constant 0.000000e+00 : f32
    %75 = vector.broadcast %cst_41 : f32 to vector<8x512xf32>
    %76 = arith.maximumf %74, %75 : vector<8x512xf32>
    %77 = arith.truncf %76 : vector<8x512xf32> to vector<8x512xbf16>
    %cst_42 = arith.constant dense<0.000000e+00> : vector<8x512xf32>
    %78 = tpu.matmul %16, %77, %cst_42 {dimension_numbers = #tpu.dot_dimension_numbers<[1], [0], [0], [1], [0, 0, 1, 1], [], []>} : vector<8x8xbf16>, vector<8x512xbf16>, vector<8x512xf32> -> vector<8x512xf32>
    %79 = vector.broadcast %21 : vector<8x1xf32> to vector<8x512xf32>
    %80 = arith.addf %78, %79 : vector<8x512xf32>
    %81 = math.tanh %80 : vector<8x512xf32>
    %82 = vector.extract_strided_slice %69 {offsets = [0, 0], sizes = [8, 256], strides = [1, 1]} : vector<8x512xf32> to vector<8x256xf32>
    %83 = arith.truncf %82 : vector<8x256xf32> to vector<8x256xbf16>
    %cst_43 = arith.constant dense<0.000000e+00> : vector<16x256xf32>
    %84 = tpu.matmul %1, %83, %cst_43 {dimension_numbers = #tpu.dot_dimension_numbers<[1], [0], [0], [1], [0, 0, 1, 1], [], []>} : vector<16x8xbf16>, vector<8x256xbf16>, vector<16x256xf32> -> vector<16x256xf32>
    %85 = vector.extract_strided_slice %84 {offsets = [0, 0], sizes = [8, 256], strides = [1, 1]} : vector<16x256xf32> to vector<8x256xf32>
    %86 = vector.extract_strided_slice %8 {offsets = [0, 0], sizes = [8, 1], strides = [1, 1]} : vector<16x1xf32> to vector<8x1xf32>
    %87 = vector.broadcast %86 : vector<8x1xf32> to vector<8x256xf32>
    %88 = arith.addf %85, %87 : vector<8x256xf32>
    %cst_44 = arith.constant 0.000000e+00 : f32
    %89 = vector.broadcast %cst_44 : f32 to vector<8x256xf32>
    %90 = arith.maximumf %88, %89 : vector<8x256xf32>
    %91 = vector.extract_strided_slice %81 {offsets = [0, 0], sizes = [8, 256], strides = [1, 1]} : vector<8x512xf32> to vector<8x256xf32>
    %92 = arith.truncf %91 : vector<8x256xf32> to vector<8x256xbf16>
    %cst_45 = arith.constant dense<0.000000e+00> : vector<16x256xf32>
    %93 = tpu.matmul %12, %92, %cst_45 {dimension_numbers = #tpu.dot_dimension_numbers<[1], [0], [0], [1], [0, 0, 1, 1], [], []>} : vector<16x8xbf16>, vector<8x256xbf16>, vector<16x256xf32> -> vector<16x256xf32>
    %94 = vector.extract_strided_slice %93 {offsets = [0, 0], sizes = [8, 256], strides = [1, 1]} : vector<16x256xf32> to vector<8x256xf32>
    %95 = vector.extract_strided_slice %19 {offsets = [0, 0], sizes = [8, 1], strides = [1, 1]} : vector<16x1xf32> to vector<8x1xf32>
    %96 = vector.broadcast %95 : vector<8x1xf32> to vector<8x256xf32>
    %97 = arith.addf %94, %96 : vector<8x256xf32>
    %cst_46 = arith.constant 0.000000e+00 : f32
    %98 = vector.broadcast %cst_46 : f32 to vector<8x256xf32>
    %99 = arith.maximumf %97, %98 : vector<8x256xf32>
    %c0_47 = arith.constant 0 : index
    %c0_48 = arith.constant 0 : index
    %c0_49 = arith.constant 0 : index
    %c0_50 = arith.constant 0 : index
    %100 = vector.load %arg6[%c0_47, %c0_48, %c0_49, %c0_50] : memref<1x2x8x512xf32, #tpu.memory_space<vmem>>, vector<1x1x8x512xf32>
    %101 = vector.shape_cast %100 : vector<1x1x8x512xf32> to vector<8x512xf32>
    %102 = vector.shape_cast %69 : vector<8x512xf32> to vector<1x1x8x512xf32>
    tpu.vector_store %arg6[%c0_47, %c0_48, %c0_49, %c0_50], %102 {strides = array<i32>} : memref<1x2x8x512xf32, #tpu.memory_space<vmem>>, vector<1x1x8x512xf32>,
    %c0_51 = arith.constant 0 : index
    %c1_52 = arith.constant 1 : index
    %c0_53 = arith.constant 0 : index
    %c0_54 = arith.constant 0 : index
    %103 = vector.load %arg6[%c0_51, %c1_52, %c0_53, %c0_54] : memref<1x2x8x512xf32, #tpu.memory_space<vmem>>, vector<1x1x8x512xf32>
    %104 = vector.shape_cast %103 : vector<1x1x8x512xf32> to vector<8x512xf32>
    %105 = vector.shape_cast %81 : vector<8x512xf32> to vector<1x1x8x512xf32>
    tpu.vector_store %arg6[%c0_51, %c1_52, %c0_53, %c0_54], %105 {strides = array<i32>} : memref<1x2x8x512xf32, #tpu.memory_space<vmem>>, vector<1x1x8x512xf32>,
    %106 = tpu.concatenate %31, %99 in 1 : vector<8x256xf32>, vector<8x256xf32> -> vector<8x512xf32>
    %c0_55 = arith.constant 0 : index
    %c0_56 = arith.constant 0 : index
    %c0_57 = arith.constant 0 : index
    %c0_58 = arith.constant 0 : index
    %107 = vector.load %arg7[%c0_55, %c0_56, %c0_57, %c0_58] : memref<1x2x8x512xf32, #tpu.memory_space<vmem>>, vector<1x1x8x512xf32>
    %108 = vector.shape_cast %107 : vector<1x1x8x512xf32> to vector<8x512xf32>
    %109 = vector.shape_cast %106 : vector<8x512xf32> to vector<1x1x8x512xf32>
    tpu.vector_store %arg7[%c0_55, %c0_56, %c0_57, %c0_58], %109 {strides = array<i32>} : memref<1x2x8x512xf32, #tpu.memory_space<vmem>>, vector<1x1x8x512xf32>,
    %110 = tpu.concatenate %43, %90 in 1 : vector<8x256xf32>, vector<8x256xf32> -> vector<8x512xf32>
    %c0_59 = arith.constant 0 : index
    %c1_60 = arith.constant 1 : index
    %c0_61 = arith.constant 0 : index
    %c0_62 = arith.constant 0 : index
    %111 = vector.load %arg7[%c0_59, %c1_60, %c0_61, %c0_62] : memref<1x2x8x512xf32, #tpu.memory_space<vmem>>, vector<1x1x8x512xf32>
    %112 = vector.shape_cast %111 : vector<1x1x8x512xf32> to vector<8x512xf32>
    %113 = vector.shape_cast %110 : vector<8x512xf32> to vector<1x1x8x512xf32>
    tpu.vector_store %arg7[%c0_59, %c1_60, %c0_61, %c0_62], %113 {strides = array<i32>} : memref<1x2x8x512xf32, #tpu.memory_space<vmem>>, vector<1x1x8x512xf32>,
    return
  }
  func.func @transform_0(%arg0: i32) -> (i32, i32, i32, i32) {
    %c0_i32 = arith.constant 0 : i32
    %c0_i32_0 = arith.constant 0 : i32
    %c0_i32_1 = arith.constant 0 : i32
    %c0_i32_2 = arith.constant 0 : i32
    return %arg0, %c0_i32, %c0_i32_0, %c0_i32_1 : i32, i32, i32, i32
  }
  func.func @transform_1(%arg0: i32) -> (i32, i32, i32) {
    %c0_i32 = arith.constant 0 : i32
    %c0_i32_0 = arith.constant 0 : i32
    %c0_i32_1 = arith.constant 0 : i32
    %c0_i32_2 = arith.constant 0 : i32
    return %c0_i32, %c0_i32_0, %c0_i32_1 : i32, i32, i32
  }
  func.func @transform_2(%arg0: i32) -> (i32, i32, i32) {
    %c0_i32 = arith.constant 0 : i32
    %c0_i32_0 = arith.constant 0 : i32
    %c0_i32_1 = arith.constant 0 : i32
    %c0_i32_2 = arith.constant 0 : i32
    return %c0_i32, %c0_i32_0, %c0_i32_1 : i32, i32, i32
  }
  func.func @transform_3(%arg0: i32) -> (i32, i32, i32) {
    %c0_i32 = arith.constant 0 : i32
    %c0_i32_0 = arith.constant 0 : i32
    %c0_i32_1 = arith.constant 0 : i32
    %c0_i32_2 = arith.constant 0 : i32
    return %c0_i32, %c0_i32_0, %c0_i32_1 : i32, i32, i32
  }
  func.func @transform_4(%arg0: i32) -> (i32, i32, i32) {
    %c0_i32 = arith.constant 0 : i32
    %c0_i32_0 = arith.constant 0 : i32
    %c0_i32_1 = arith.constant 0 : i32
    %c0_i32_2 = arith.constant 0 : i32
    return %c0_i32, %c0_i32_0, %c0_i32_1 : i32, i32, i32
  }
  func.func @transform_5(%arg0: i32) -> (i32, i32, i32, i32) {
    %c0_i32 = arith.constant 0 : i32
    %c0_i32_0 = arith.constant 0 : i32
    %c0_i32_1 = arith.constant 0 : i32
    %c0_i32_2 = arith.constant 0 : i32
    return %arg0, %c0_i32, %c0_i32_0, %c0_i32_1 : i32, i32, i32, i32
  }
  func.func @transform_6(%arg0: i32) -> (i32, i32, i32, i32) {
    %c0_i32 = arith.constant 0 : i32
    %c0_i32_0 = arith.constant 0 : i32
    %c0_i32_1 = arith.constant 0 : i32
    %c0_i32_2 = arith.constant 0 : i32
    return %arg0, %c0_i32, %c0_i32_0, %c0_i32_1 : i32, i32, i32, i32
  }
}

</mosaic_0001>

<llo_original>
// kernel: squeeze.12
$region0: #{squeeze.12}
  %s0 = inlined_call_operand.vmem [shape: f32[2,1,8,256], index: 0, kind: input, shape index: {}]
  %s1 = inlined_call_operand.hbm [shape: f32[2,8,16,16], index: 1, kind: output, shape index: {}]
  $region1: #{squeeze.12} parent=0
    #allocation0 [shape = 'u8[131072]{0}', space=vmem, size = 0x20000, scoped, tag = 'operand span for operand 1']
    #allocation1 [shape = 's32[1]{0}', space=sflag, size = 0x4, scoped, tag = 'scoped memory for squeeze.12']
    %2 = vsyncpa [#allocation1], 0
    %v3 = vld [vmem:[%s0] sm:$0xff]
    %vm4 = vcmask 130048
    %5 = vst.msk [vmem:[#allocation0] ss:$16 sm:$0x3] %vm4, %v3
    %6 = vst.msk [vmem:[#allocation0] ss:$16 sm:$0xc] %vm4, %v3
    %7 = vst.msk [vmem:[#allocation0] ss:$16 sm:$0x30] %vm4, %v3
    %8 = vst.msk [vmem:[#allocation0] ss:$16 sm:$0xc0] %vm4, %v3
    %s9 = scalar_lea.vmem %s0, 8
    %v10 = vld [vmem:[%s9] sm:$0xff]
    %vm11 = vcmask 130048
    %s12 = scalar_lea.vmem [#allocation0], 8
    %13 = vst.msk [vmem:[%s12] ss:$16 sm:$0x3] %vm11, %v10
    %s14 = scalar_lea.vmem [#allocation0], 8
    %15 = vst.msk [vmem:[%s14] ss:$16 sm:$0xc] %vm11, %v10
    %s16 = scalar_lea.vmem [#allocation0], 8
    %17 = vst.msk [vmem:[%s16] ss:$16 sm:$0x30] %vm11, %v10
    %s18 = scalar_lea.vmem [#allocation0], 8
    %19 = vst.msk [vmem:[%s18] ss:$16 sm:$0xc0] %vm11, %v10
    %s20 = scalar_lea.vmem %s0, 16
    %v21 = vld [vmem:[%s20] sm:$0xff]
    %vm22 = vcmask 130048
    %s23 = scalar_lea.vmem [#allocation0], 128
    %24 = vst.msk [vmem:[%s23] ss:$16 sm:$0x3] %vm22, %v21
    %s25 = scalar_lea.vmem [#allocation0], 128
    %26 = vst.msk [vmem:[%s25] ss:$16 sm:$0xc] %vm22, %v21
    %s27 = scalar_lea.vmem [#allocation0], 128
    %28 = vst.msk [vmem:[%s27] ss:$16 sm:$0x30] %vm22, %v21
    %s29 = scalar_lea.vmem [#allocation0], 128
    %30 = vst.msk [vmem:[%s29] ss:$16 sm:$0xc0] %vm22, %v21
    %s31 = scalar_lea.vmem %s0, 24
    %v32 = vld [vmem:[%s31] sm:$0xff]
    %vm33 = vcmask 130048
    %s34 = scalar_lea.vmem [#allocation0], 136
    %35 = vst.msk [vmem:[%s34] ss:$16 sm:$0x3] %vm33, %v32
    %s36 = scalar_lea.vmem [#allocation0], 136
    %37 = vst.msk [vmem:[%s36] ss:$16 sm:$0xc] %vm33, %v32
    %s38 = scalar_lea.vmem [#allocation0], 136
    %39 = vst.msk [vmem:[%s38] ss:$16 sm:$0x30] %vm33, %v32
    %s40 = scalar_lea.vmem [#allocation0], 136
    %41 = vst.msk [vmem:[%s40] ss:$16 sm:$0xc0] %vm33, %v32
    %v42 = vld.sshfl [vmem:[%s0] sm:$0xff pattern:$0xb3a29180]
    %43 = vrot.lane.b32.xlu0 %v42, 112
    %v44 = vpop.permute.xlu0 %43
    %vm45 = vcmask 130048
    %s46 = scalar_lea.vmem [#allocation0], 1
    %47 = vst.msk [vmem:[%s46] ss:$8 sm:$0xf] %vm45, %v44
    %s48 = scalar_lea.vmem [#allocation0], 1
    %49 = vst.msk [vmem:[%s48] ss:$8 sm:$0xf0] %vm45, %v44
    %s50 = scalar_lea.vmem %s0, 4
    %v51 = vld.sshfl [vmem:[%s50] sm:$0xff pattern:$0xb3a29180]
    %52 = vrot.lane.b32.xlu0 %v51, 112
    %v53 = vpop.permute.xlu0 %52
    %vm54 = vcmask 130048
    %s55 = scalar_lea.vmem [#allocation0], 65
    %56 = vst.msk [vmem:[%s55] ss:$8 sm:$0xf] %vm54, %v53
    %s57 = scalar_lea.vmem [#allocation0], 65
    %58 = vst.msk [vmem:[%s57] ss:$8 sm:$0xf0] %vm54, %v53
    %s59 = scalar_lea.vmem %s0, 16
    %v60 = vld.sshfl [vmem:[%s59] sm:$0xff pattern:$0xb3a29180]
    %61 = vrot.lane.b32.xlu0 %v60, 112
    %v62 = vpop.permute.xlu0 %61
    %vm63 = vcmask 130048
    %s64 = scalar_lea.vmem [#allocation0], 129
    %65 = vst.msk [vmem:[%s64] ss:$8 sm:$0xf] %vm63, %v62
    %s66 = scalar_lea.vmem [#allocation0], 129
    %67 = vst.msk [vmem:[%s66] ss:$8 sm:$0xf0] %vm63, %v62
    %s68 = scalar_lea.vmem %s0, 20
    %v69 = vld.sshfl [vmem:[%s68] sm:$0xff pattern:$0xb3a29180]
    %70 = vrot.lane.b32.xlu0 %v69, 112
    %v71 = vpop.permute.xlu0 %70
    %vm72 = vcmask 130048
    %s73 = scalar_lea.vmem [#allocation0], 193
    %74 = vst.msk [vmem:[%s73] ss:$8 sm:$0xf] %vm72, %v71
    %s75 = scalar_lea.vmem [#allocation0], 193
    %76 = vst.msk [vmem:[%s75] ss:$8 sm:$0xf0] %vm72, %v71
    %v77 = vld.sshfl [vmem:[%s0] sm:$0xff pattern:$0xb3a29180]
    %78 = vrot.lane.b32.xlu0 %v77, 96
    %v79 = vpop.permute.xlu0 %78
    %vm80 = vcmask 130048
    %s81 = scalar_lea.vmem [#allocation0], 2
    %82 = vst.msk [vmem:[%s81] ss:$8 sm:$0xf] %vm80, %v79
    %s83 = scalar_lea.vmem [#allocation0], 2
    %84 = vst.msk [vmem:[%s83] ss:$8 sm:$0xf0] %vm80, %v79
    %s85 = scalar_lea.vmem %s0, 4
    %v86 = vld.sshfl [vmem:[%s85] sm:$0xff pattern:$0xb3a29180]
    %87 = vrot.lane.b32.xlu0 %v86, 96
    %v88 = vpop.permute.xlu0 %87
    %vm89 = vcmask 130048
    %s90 = scalar_lea.vmem [#allocation0], 66
    %91 = vst.msk [vmem:[%s90] ss:$8 sm:$0xf] %vm89, %v88
    %s92 = scalar_lea.vmem [#allocation0], 66
    %93 = vst.msk [vmem:[%s92] ss:$8 sm:$0xf0] %vm89, %v88
    %s94 = scalar_lea.vmem %s0, 16
    %v95 = vld.sshfl [vmem:[%s94] sm:$0xff pattern:$0xb3a29180]
    %96 = vrot.lane.b32.xlu0 %v95, 96
    %v97 = vpop.permute.xlu0 %96
    %vm98 = vcmask 130048
    %s99 = scalar_lea.vmem [#allocation0], 130
    %100 = vst.msk [vmem:[%s99] ss:$8 sm:$0xf] %vm98, %v97
    %s101 = scalar_lea.vmem [#allocation0], 130
    %102 = vst.msk [vmem:[%s101] ss:$8 sm:$0xf0] %vm98, %v97
    %s103 = scalar_lea.vmem %s0, 20
    %v104 = vld.sshfl [vmem:[%s103] sm:$0xff pattern:$0xb3a29180]
    %105 = vrot.lane.b32.xlu0 %v104, 96
    %v106 = vpop.permute.xlu0 %105
    %vm107 = vcmask 130048
    %s108 = scalar_lea.vmem [#allocation0], 194
    %109 = vst.msk [vmem:[%s108] ss:$8 sm:$0xf] %vm107, %v106
    %s110 = scalar_lea.vmem [#allocation0], 194
    %111 = vst.msk [vmem:[%s110] ss:$8 sm:$0xf0] %vm107, %v106
    %v112 = vld.sshfl [vmem:[%s0] sm:$0xff pattern:$0xb3a29180]
    %113 = vrot.lane.b32.xlu0 %v112, 80
    %v114 = vpop.permute.xlu0 %113
    %vm115 = vcmask 130048
    %s116 = scalar_lea.vmem [#allocation0], 3
    %117 = vst.msk [vmem:[%s116] ss:$8 sm:$0xf] %vm115, %v114
    %s118 = scalar_lea.vmem [#allocation0], 3
    %119 = vst.msk [vmem:[%s118] ss:$8 sm:$0xf0] %vm115, %v114
    %s120 = scalar_lea.vmem %s0, 4
    %v121 = vld.sshfl [vmem:[%s120] sm:$0xff pattern:$0xb3a29180]
    %122 = vrot.lane.b32.xlu0 %v121, 80
    %v123 = vpop.permute.xlu0 %122
    %vm124 = vcmask 130048
    %s125 = scalar_lea.vmem [#allocation0], 67
    %126 = vst.msk [vmem:[%s125] ss:$8 sm:$0xf] %vm124, %v123
    %s127 = scalar_lea.vmem [#allocation0], 67
    %128 = vst.msk [vmem:[%s127] ss:$8 sm:$0xf0] %vm124, %v123
    %s129 = scalar_lea.vmem %s0, 16
    %v130 = vld.sshfl [vmem:[%s129] sm:$0xff pattern:$0xb3a29180]
    %131 = vrot.lane.b32.xlu0 %v130, 80
    %v132 = vpop.permute.xlu0 %131
    %vm133 = vcmask 130048
    %s134 = scalar_lea.vmem [#allocation0], 131
    %135 = vst.msk [vmem:[%s134] ss:$8 sm:$0xf] %vm133, %v132
    %s136 = scalar_lea.vmem [#allocation0], 131
    %137 = vst.msk [vmem:[%s136] ss:$8 sm:$0xf0] %vm133, %v132
    %s138 = scalar_lea.vmem %s0, 20
    %v139 = vld.sshfl [vmem:[%s138] sm:$0xff pattern:$0xb3a29180]
    %140 = vrot.lane.b32.xlu0 %v139, 80
    %v141 = vpop.permute.xlu0 %140
    %vm142 = vcmask 130048
    %s143 = scalar_lea.vmem [#allocation0], 195
    %144 = vst.msk [vmem:[%s143] ss:$8 sm:$0xf] %vm142, %v141
    %s145 = scalar_lea.vmem [#allocation0], 195
    %146 = vst.msk [vmem:[%s145] ss:$8 sm:$0xf0] %vm142, %v141
    %v147 = vld.sshfl [vmem:[%s0] sm:$0xff pattern:$0xb3a29180]
    %148 = vrot.lane.b32.xlu0 %v147, 64
    %v149 = vpop.permute.xlu0 %148
    %vm150 = vcmask 130048
    %s151 = scalar_lea.vmem [#allocation0], 4
    %152 = vst.msk [vmem:[%s151] ss:$8 sm:$0xf] %vm150, %v149
    %s153 = scalar_lea.vmem [#allocation0], 4
    %154 = vst.msk [vmem:[%s153] ss:$8 sm:$0xf0] %vm150, %v149
    %s155 = scalar_lea.vmem %s0, 4
    %v156 = vld.sshfl [vmem:[%s155] sm:$0xff pattern:$0xb3a29180]
    %157 = vrot.lane.b32.xlu0 %v156, 64
    %v158 = vpop.permute.xlu0 %157
    %vm159 = vcmask 130048
    %s160 = scalar_lea.vmem [#allocation0], 68
    %161 = vst.msk [vmem:[%s160] ss:$8 sm:$0xf] %vm159, %v158
    %s162 = scalar_lea.vmem [#allocation0], 68
    %163 = vst.msk [vmem:[%s162] ss:$8 sm:$0xf0] %vm159, %v158
    %s164 = scalar_lea.vmem %s0, 16
    %v165 = vld.sshfl [vmem:[%s164] sm:$0xff pattern:$0xb3a29180]
    %166 = vrot.lane.b32.xlu0 %v165, 64
    %v167 = vpop.permute.xlu0 %166
    %vm168 = vcmask 130048
    %s169 = scalar_lea.vmem [#allocation0], 132
    %170 = vst.msk [vmem:[%s169] ss:$8 sm:$0xf] %vm168, %v167
    %s171 = scalar_lea.vmem [#allocation0], 132
    %172 = vst.msk [vmem:[%s171] ss:$8 sm:$0xf0] %vm168, %v167
    %s173 = scalar_lea.vmem %s0, 20
    %v174 = vld.sshfl [vmem:[%s173] sm:$0xff pattern:$0xb3a29180]
    %175 = vrot.lane.b32.xlu0 %v174, 64
    %v176 = vpop.permute.xlu0 %175
    %vm177 = vcmask 130048
    %s178 = scalar_lea.vmem [#allocation0], 196
    %179 = vst.msk [vmem:[%s178] ss:$8 sm:$0xf] %vm177, %v176
    %s180 = scalar_lea.vmem [#allocation0], 196
    %181 = vst.msk [vmem:[%s180] ss:$8 sm:$0xf0] %vm177, %v176
    %v182 = vld.sshfl [vmem:[%s0] sm:$0xff pattern:$0xb3a29180]
    %183 = vrot.lane.b32.xlu0 %v182, 48
    %v184 = vpop.permute.xlu0 %183
    %vm185 = vcmask 130048
    %s186 = scalar_lea.vmem [#allocation0], 5
    %187 = vst.msk [vmem:[%s186] ss:$8 sm:$0xf] %vm185, %v184
    %s188 = scalar_lea.vmem [#allocation0], 5
    %189 = vst.msk [vmem:[%s188] ss:$8 sm:$0xf0] %vm185, %v184
    %s190 = scalar_lea.vmem %s0, 4
    %v191 = vld.sshfl [vmem:[%s190] sm:$0xff pattern:$0xb3a29180]
    %192 = vrot.lane.b32.xlu0 %v191, 48
    %v193 = vpop.permute.xlu0 %192
    %vm194 = vcmask 130048
    %s195 = scalar_lea.vmem [#allocation0], 69
    %196 = vst.msk [vmem:[%s195] ss:$8 sm:$0xf] %vm194, %v193
    %s197 = scalar_lea.vmem [#allocation0], 69
    %198 = vst.msk [vmem:[%s197] ss:$8 sm:$0xf0] %vm194, %v193
    %s199 = scalar_lea.vmem %s0, 16
    %v200 = vld.sshfl [vmem:[%s199] sm:$0xff pattern:$0xb3a29180]
    %201 = vrot.lane.b32.xlu0 %v200, 48
    %v202 = vpop.permute.xlu0 %201
    %vm203 = vcmask 130048
    %s204 = scalar_lea.vmem [#allocation0], 133
    %205 = vst.msk [vmem:[%s204] ss:$8 sm:$0xf] %vm203, %v202
    %s206 = scalar_lea.vmem [#allocation0], 133
    %207 = vst.msk [vmem:[%s206] ss:$8 sm:$0xf0] %vm203, %v202
    %s208 = scalar_lea.vmem %s0, 20
    %v209 = vld.sshfl [vmem:[%s208] sm:$0xff pattern:$0xb3a29180]
    %210 = vrot.lane.b32.xlu0 %v209, 48
    %v211 = vpop.permute.xlu0 %210
    %vm212 = vcmask 130048
    %s213 = scalar_lea.vmem [#allocation0], 197
    %214 = vst.msk [vmem:[%s213] ss:$8 sm:$0xf] %vm212, %v211
    %s215 = scalar_lea.vmem [#allocation0], 197
    %216 = vst.msk [vmem:[%s215] ss:$8 sm:$0xf0] %vm212, %v211
    %v217 = vld.sshfl [vmem:[%s0] sm:$0xff pattern:$0xb3a29180]
    %218 = vrot.lane.b32.xlu0 %v217, 32
    %v219 = vpop.permute.xlu0 %218
    %vm220 = vcmask 130048
    %s221 = scalar_lea.vmem [#allocation0], 6
    %222 = vst.msk [vmem:[%s221] ss:$8 sm:$0xf] %vm220, %v219
    %s223 = scalar_lea.vmem [#allocation0], 6
    %224 = vst.msk [vmem:[%s223] ss:$8 sm:$0xf0] %vm220, %v219
    %s225 = scalar_lea.vmem %s0, 4
    %v226 = vld.sshfl [vmem:[%s225] sm:$0xff pattern:$0xb3a29180]
    %227 = vrot.lane.b32.xlu0 %v226, 32
    %v228 = vpop.permute.xlu0 %227
    %vm229 = vcmask 130048
    %s230 = scalar_lea.vmem [#allocation0], 70
    %231 = vst.msk [vmem:[%s230] ss:$8 sm:$0xf] %vm229, %v228
    %s232 = scalar_lea.vmem [#allocation0], 70
    %233 = vst.msk [vmem:[%s232] ss:$8 sm:$0xf0] %vm229, %v228
    %s234 = scalar_lea.vmem %s0, 16
    %v235 = vld.sshfl [vmem:[%s234] sm:$0xff pattern:$0xb3a29180]
    %236 = vrot.lane.b32.xlu0 %v235, 32
    %v237 = vpop.permute.xlu0 %236
    %vm238 = vcmask 130048
    %s239 = scalar_lea.vmem [#allocation0], 134
    %240 = vst.msk [vmem:[%s239] ss:$8 sm:$0xf] %vm238, %v237
    %s241 = scalar_lea.vmem [#allocation0], 134
    %242 = vst.msk [vmem:[%s241] ss:$8 sm:$0xf0] %vm238, %v237
    %s243 = scalar_lea.vmem %s0, 20
    %v244 = vld.sshfl [vmem:[%s243] sm:$0xff pattern:$0xb3a29180]
    %245 = vrot.lane.b32.xlu0 %v244, 32
    %v246 = vpop.permute.xlu0 %245
    %vm247 = vcmask 130048
    %s248 = scalar_lea.vmem [#allocation0], 198
    %249 = vst.msk [vmem:[%s248] ss:$8 sm:$0xf] %vm247, %v246
    %s250 = scalar_lea.vmem [#allocation0], 198
    %251 = vst.msk [vmem:[%s250] ss:$8 sm:$0xf0] %vm247, %v246
    %v252 = vld.sshfl [vmem:[%s0] sm:$0xff pattern:$0xb3a29180]
    %253 = vrot.lane.b32.xlu0 %v252, 16
    %v254 = vpop.permute.xlu0 %253
    %vm255 = vcmask 130048
    %s256 = scalar_lea.vmem [#allocation0], 7
    %257 = vst.msk [vmem:[%s256] ss:$8 sm:$0xf] %vm255, %v254
    %s258 = scalar_lea.vmem [#allocation0], 7
    %259 = vst.msk [vmem:[%s258] ss:$8 sm:$0xf0] %vm255, %v254
    %s260 = scalar_lea.vmem %s0, 4
    %v261 = vld.sshfl [vmem:[%s260] sm:$0xff pattern:$0xb3a29180]
    %262 = vrot.lane.b32.xlu0 %v261, 16
    %v263 = vpop.permute.xlu0 %262
    %vm264 = vcmask 130048
    %s265 = scalar_lea.vmem [#allocation0], 71
    %266 = vst.msk [vmem:[%s265] ss:$8 sm:$0xf] %vm264, %v263
    %s267 = scalar_lea.vmem [#allocation0], 71
    %268 = vst.msk [vmem:[%s267] ss:$8 sm:$0xf0] %vm264, %v263
    %s269 = scalar_lea.vmem %s0, 16
    %v270 = vld.sshfl [vmem:[%s269] sm:$0xff pattern:$0xb3a29180]
    %271 = vrot.lane.b32.xlu0 %v270, 16
    %v272 = vpop.permute.xlu0 %271
    %vm273 = vcmask 130048
    %s274 = scalar_lea.vmem [#allocation0], 135
    %275 = vst.msk [vmem:[%s274] ss:$8 sm:$0xf] %vm273, %v272
    %s276 = scalar_lea.vmem [#allocation0], 135
    %277 = vst.msk [vmem:[%s276] ss:$8 sm:$0xf0] %vm273, %v272
    %s278 = scalar_lea.vmem %s0, 20
    %v279 = vld.sshfl [vmem:[%s278] sm:$0xff pattern:$0xb3a29180]
    %280 = vrot.lane.b32.xlu0 %v279, 16
    %v281 = vpop.permute.xlu0 %280
    %vm282 = vcmask 130048
    %s283 = scalar_lea.vmem [#allocation0], 199
    %284 = vst.msk [vmem:[%s283] ss:$8 sm:$0xf] %vm282, %v281
    %s285 = scalar_lea.vmem [#allocation0], 199
    %286 = vst.msk [vmem:[%s285] ss:$8 sm:$0xf0] %vm282, %v281
    %s288 = ssub.s32 4096, 4096
    %289 = vsyncadd [#allocation1], %s288
    %s291 = sshll.u32 [#allocation0], 4
    %s292 = int_to_ptr.vmem [resolvable:$true] %s291
    %294 = dma.vmem_to_hbm [thread:$0]  %s292, 4096, %s1, [#allocation1]
    %295 = dma.done [#allocation1], 4096
    %296 = vsyncpa [#allocation1], 1

// kernel: squeeze.10
$region0: #{squeeze.10}
  %s0 = inlined_call_operand.vmem [shape: f32[2,1,4,256], index: 0, kind: input, shape index: {}]
  %s1 = inlined_call_operand.hbm [shape: f32[2,4,16,16], index: 1, kind: output, shape index: {}]
  $region1: #{squeeze.10} parent=0
    #allocation0 [shape = 'u8[65536]{0}', space=vmem, size = 0x10000, scoped, tag = 'operand span for operand 1']
    #allocation1 [shape = 's32[1]{0}', space=sflag, size = 0x4, scoped, tag = 'scoped memory for squeeze.10']
    #allocation2 [shape = 'u8[16384]{0}', space=vmem, size = 0x4000, scoped, tag = 'scoped mem for input reshape']
    %2 = vsyncpa [#allocation1], 0
    %s4 = sshllo.u32 0, 4
    %s5 = smul.addr 4, 3
    %s6 = scalar_lea.vmem %s0, %s5
    %v7 = vld [vmem:[%s6] sm:%s4]
    %s8 = scalar_lea.vmem [#allocation2], 24
    %9 = vst [vmem:[%s8] sm:%s4] %v7
    %s10 = smul.addr 4, 2
    %s11 = scalar_lea.vmem %s0, %s10
    %v12 = vld [vmem:[%s11] sm:%s4]
    %s13 = scalar_lea.vmem [#allocation2], 16
    %14 = vst [vmem:[%s13] sm:%s4] %v12
    %s15 = scalar_lea.vmem %s0, 4
    %v16 = vld [vmem:[%s15] sm:%s4]
    %s17 = scalar_lea.vmem [#allocation2], 8
    %18 = vst [vmem:[%s17] sm:%s4] %v16
    %v19 = vld [vmem:[%s0] sm:%s4]
    %20 = vst [vmem:[#allocation2] sm:%s4] %v19
    %v21 = vld [vmem:[#allocation2] sm:$0xf]
    %vm22 = vcmask 130048
    %23 = vst.msk [vmem:[#allocation0] ss:$16 sm:$0x3] %vm22, %v21
    %24 = vst.msk [vmem:[#allocation0] ss:$16 sm:$0xc] %vm22, %v21
    %s25 = scalar_lea.vmem [#allocation2], 8
    %v26 = vld [vmem:[%s25] sm:$0xf]
    %vm27 = vcmask 130048
    %s28 = scalar_lea.vmem [#allocation0], 8
    %29 = vst.msk [vmem:[%s28] ss:$16 sm:$0x3] %vm27, %v26
    %s30 = scalar_lea.vmem [#allocation0], 8
    %31 = vst.msk [vmem:[%s30] ss:$16 sm:$0xc] %vm27, %v26
    %s32 = scalar_lea.vmem [#allocation2], 16
    %v33 = vld [vmem:[%s32] sm:$0xf]
    %vm34 = vcmask 130048
    %s35 = scalar_lea.vmem [#allocation0], 64
    %36 = vst.msk [vmem:[%s35] ss:$16 sm:$0x3] %vm34, %v33
    %s37 = scalar_lea.vmem [#allocation0], 64
    %38 = vst.msk [vmem:[%s37] ss:$16 sm:$0xc] %vm34, %v33
    %s39 = scalar_lea.vmem [#allocation2], 24
    %v40 = vld [vmem:[%s39] sm:$0xf]
    %vm41 = vcmask 130048
    %s42 = scalar_lea.vmem [#allocation0], 72
    %43 = vst.msk [vmem:[%s42] ss:$16 sm:$0x3] %vm41, %v40
    %s44 = scalar_lea.vmem [#allocation0], 72
    %45 = vst.msk [vmem:[%s44] ss:$16 sm:$0xc] %vm41, %v40
    %v46 = vld.sshfl [vmem:[#allocation2] sm:$0xff pattern:$0xb3a29180]
    %47 = vrot.lane.b32.xlu0 %v46, 112
    %v48 = vpop.permute.xlu0 %47
    %vm49 = vcmask 130048
    %s50 = scalar_lea.vmem [#allocation0], 1
    %51 = vst.msk [vmem:[%s50] ss:$8 sm:$0xf] %vm49, %v48
    %s52 = scalar_lea.vmem [#allocation0], 1
    %53 = vst.msk [vmem:[%s52] ss:$8 sm:$0xf0] %vm49, %v48
    %s54 = scalar_lea.vmem [#allocation2], 16
    %v55 = vld.sshfl [vmem:[%s54] sm:$0xff pattern:$0xb3a29180]
    %56 = vrot.lane.b32.xlu0 %v55, 112
    %v57 = vpop.permute.xlu0 %56
    %vm58 = vcmask 130048
    %s59 = scalar_lea.vmem [#allocation0], 65
    %60 = vst.msk [vmem:[%s59] ss:$8 sm:$0xf] %vm58, %v57
    %s61 = scalar_lea.vmem [#allocation0], 65
    %62 = vst.msk [vmem:[%s61] ss:$8 sm:$0xf0] %vm58, %v57
    %v63 = vld.sshfl [vmem:[#allocation2] sm:$0xff pattern:$0xb3a29180]
    %64 = vrot.lane.b32.xlu0 %v63, 96
    %v65 = vpop.permute.xlu0 %64
    %vm66 = vcmask 130048
    %s67 = scalar_lea.vmem [#allocation0], 2
    %68 = vst.msk [vmem:[%s67] ss:$8 sm:$0xf] %vm66, %v65
    %s69 = scalar_lea.vmem [#allocation0], 2
    %70 = vst.msk [vmem:[%s69] ss:$8 sm:$0xf0] %vm66, %v65
    %s71 = scalar_lea.vmem [#allocation2], 16
    %v72 = vld.sshfl [vmem:[%s71] sm:$0xff pattern:$0xb3a29180]
    %73 = vrot.lane.b32.xlu0 %v72, 96
    %v74 = vpop.permute.xlu0 %73
    %vm75 = vcmask 130048
    %s76 = scalar_lea.vmem [#allocation0], 66
    %77 = vst.msk [vmem:[%s76] ss:$8 sm:$0xf] %vm75, %v74
    %s78 = scalar_lea.vmem [#allocation0], 66
    %79 = vst.msk [vmem:[%s78] ss:$8 sm:$0xf0] %vm75, %v74
    %v80 = vld.sshfl [vmem:[#allocation2] sm:$0xff pattern:$0xb3a29180]
    %81 = vrot.lane.b32.xlu0 %v80, 80
    %v82 = vpop.permute.xlu0 %81
    %vm83 = vcmask 130048
    %s84 = scalar_lea.vmem [#allocation0], 3
    %85 = vst.msk [vmem:[%s84] ss:$8 sm:$0xf] %vm83, %v82
    %s86 = scalar_lea.vmem [#allocation0], 3
    %87 = vst.msk [vmem:[%s86] ss:$8 sm:$0xf0] %vm83, %v82
    %s88 = scalar_lea.vmem [#allocation2], 16
    %v89 = vld.sshfl [vmem:[%s88] sm:$0xff pattern:$0xb3a29180]
    %90 = vrot.lane.b32.xlu0 %v89, 80
    %v91 = vpop.permute.xlu0 %90
    %vm92 = vcmask 130048
    %s93 = scalar_lea.vmem [#allocation0], 67
    %94 = vst.msk [vmem:[%s93] ss:$8 sm:$0xf] %vm92, %v91
    %s95 = scalar_lea.vmem [#allocation0], 67
    %96 = vst.msk [vmem:[%s95] ss:$8 sm:$0xf0] %vm92, %v91
    %v97 = vld.sshfl [vmem:[#allocation2] sm:$0xff pattern:$0xb3a29180]
    %98 = vrot.lane.b32.xlu0 %v97, 64
    %v99 = vpop.permute.xlu0 %98
    %vm100 = vcmask 130048
    %s101 = scalar_lea.vmem [#allocation0], 4
    %102 = vst.msk [vmem:[%s101] ss:$8 sm:$0xf] %vm100, %v99
    %s103 = scalar_lea.vmem [#allocation0], 4
    %104 = vst.msk [vmem:[%s103] ss:$8 sm:$0xf0] %vm100, %v99
    %s105 = scalar_lea.vmem [#allocation2], 16
    %v106 = vld.sshfl [vmem:[%s105] sm:$0xff pattern:$0xb3a29180]
    %107 = vrot.lane.b32.xlu0 %v106, 64
    %v108 = vpop.permute.xlu0 %107
    %vm109 = vcmask 130048
    %s110 = scalar_lea.vmem [#allocation0], 68
    %111 = vst.msk [vmem:[%s110] ss:$8 sm:$0xf] %vm109, %v108
    %s112 = scalar_lea.vmem [#allocation0], 68
    %113 = vst.msk [vmem:[%s112] ss:$8 sm:$0xf0] %vm109, %v108
    %v114 = vld.sshfl [vmem:[#allocation2] sm:$0xff pattern:$0xb3a29180]
    %115 = vrot.lane.b32.xlu0 %v114, 48
    %v116 = vpop.permute.xlu0 %115
    %vm117 = vcmask 130048
    %s118 = scalar_lea.vmem [#allocation0], 5
    %119 = vst.msk [vmem:[%s118] ss:$8 sm:$0xf] %vm117, %v116
    %s120 = scalar_lea.vmem [#allocation0], 5
    %121 = vst.msk [vmem:[%s120] ss:$8 sm:$0xf0] %vm117, %v116
    %s122 = scalar_lea.vmem [#allocation2], 16
    %v123 = vld.sshfl [vmem:[%s122] sm:$0xff pattern:$0xb3a29180]
    %124 = vrot.lane.b32.xlu0 %v123, 48
    %v125 = vpop.permute.xlu0 %124
    %vm126 = vcmask 130048
    %s127 = scalar_lea.vmem [#allocation0], 69
    %128 = vst.msk [vmem:[%s127] ss:$8 sm:$0xf] %vm126, %v125
    %s129 = scalar_lea.vmem [#allocation0], 69
    %130 = vst.msk [vmem:[%s129] ss:$8 sm:$0xf0] %vm126, %v125
    %v131 = vld.sshfl [vmem:[#allocation2] sm:$0xff pattern:$0xb3a29180]
    %132 = vrot.lane.b32.xlu0 %v131, 32
    %v133 = vpop.permute.xlu0 %132
    %vm134 = vcmask 130048
    %s135 = scalar_lea.vmem [#allocation0], 6
    %136 = vst.msk [vmem:[%s135] ss:$8 sm:$0xf] %vm134, %v133
    %s137 = scalar_lea.vmem [#allocation0], 6
    %138 = vst.msk [vmem:[%s137] ss:$8 sm:$0xf0] %vm134, %v133
    %s139 = scalar_lea.vmem [#allocation2], 16
    %v140 = vld.sshfl [vmem:[%s139] sm:$0xff pattern:$0xb3a29180]
    %141 = vrot.lane.b32.xlu0 %v140, 32
    %v142 = vpop.permute.xlu0 %141
    %vm143 = vcmask 130048
    %s144 = scalar_lea.vmem [#allocation0], 70
    %145 = vst.msk [vmem:[%s144] ss:$8 sm:$0xf] %vm143, %v142
    %s146 = scalar_lea.vmem [#allocation0], 70
    %147 = vst.msk [vmem:[%s146] ss:$8 sm:$0xf0] %vm143, %v142
    %v148 = vld.sshfl [vmem:[#allocation2] sm:$0xff pattern:$0xb3a29180]
    %149 = vrot.lane.b32.xlu0 %v148, 16
    %v150 = vpop.permute.xlu0 %149
    %vm151 = vcmask 130048
    %s152 = scalar_lea.vmem [#allocation0], 7
    %153 = vst.msk [vmem:[%s152] ss:$8 sm:$0xf] %vm151, %v150
    %s154 = scalar_lea.vmem [#allocation0], 7
    %155 = vst.msk [vmem:[%s154] ss:$8 sm:$0xf0] %vm151, %v150
    %s156 = scalar_lea.vmem [#allocation2], 16
    %v157 = vld.sshfl [vmem:[%s156] sm:$0xff pattern:$0xb3a29180]
    %158 = vrot.lane.b32.xlu0 %v157, 16
    %v159 = vpop.permute.xlu0 %158
    %vm160 = vcmask 130048
    %s161 = scalar_lea.vmem [#allocation0], 71
    %162 = vst.msk [vmem:[%s161] ss:$8 sm:$0xf] %vm160, %v159
    %s163 = scalar_lea.vmem [#allocation0], 71
    %164 = vst.msk [vmem:[%s163] ss:$8 sm:$0xf0] %vm160, %v159
    %s166 = ssub.s32 2048, 2048
    %167 = vsyncadd [#allocation1], %s166
    %s169 = sshll.u32 [#allocation0], 4
    %s170 = int_to_ptr.vmem [resolvable:$true] %s169
    %172 = dma.vmem_to_hbm [thread:$0]  %s170, 2048, %s1, [#allocation1]
    %173 = dma.done [#allocation1], 2048
    %174 = vsyncpa [#allocation1], 1

// kernel: trans_net_forward.1
$region0: #{trans_net_forward.1}
  #allocation0 [shape = 'u32[]', space=smem, size = 0x4, offset = 0x4, fixed_abs, tag = 'smem constant byte address 0x4 - core index']
  #allocation1 [shape = 'u32[144,128]{1,0:T(1,128)}', space=vmem, size = 0x12000, scoped, tag = 'internal scratch']
  %s0 = inlined_call_operand.vmem [shape: bf16[2,2,8,256], index: 0, kind: input, shape index: {}]
  %s1 = inlined_call_operand.vmem [shape: bf16[2,16,8], index: 1, kind: input, shape index: {}]
  %s2 = inlined_call_operand.vmem [shape: f32[2,16,8], index: 2, kind: input, shape index: {}]
  %s3 = inlined_call_operand.vmem [shape: bf16[2,8,8], index: 3, kind: input, shape index: {}]
  %s4 = inlined_call_operand.vmem [shape: f32[2,40,1], index: 4, kind: input, shape index: {}]
  %s5 = inlined_call_operand.vmem [shape: f32[2,2,8,512], index: 5, kind: output, shape index: {0}]
  %s6 = inlined_call_operand.vmem [shape: f32[2,2,8,512], index: 6, kind: output, shape index: {1}]
  %7 = xla_tuple %s5, %s6
  %s8 = sld [smem:[#allocation0]]
  $region61: #{trans_net_forward.1} parent=0
    _
  %s10 = ssub.s32 1, %s8
  %s11 = scalar_select 0, %s10, %s8
  loop: start=0, step=1, limit=4
  $region2: #{trans_net_forward.1} parent=0 // loop_pre_header
    _
  $region3: #{trans_net_forward.1} parent=0 // loop_header
    %s13 = sphi 0, %s17
    %p14 = scmp.ge.s32.totalorder %s13, 4
    %s23 = sphi 0, %s25
    %s26 = sphi 0, %s23
    %s27 = sphi 0, %s26
    %s43 = sphi 0, %s27
    %s47 = sphi 0, %s47
    %s49 = sphi 0, %s47
    %s50 = sphi 0, %s49
    %s64 = sphi 0, %s50
    %s68 = sphi 0, %s68
    %s70 = sphi 0, %s68
    %s71 = sphi 0, %s70
    %s85 = sphi 0, %s71
    %s89 = sphi 0, %s89
    %s91 = sphi 0, %s89
    %s92 = sphi 0, %s91
    %s106 = sphi 0, %s92
    %s110 = sphi 0, %s110
    %s112 = sphi 0, %s110
    %s113 = sphi 0, %s112
    %s127 = sphi 0, %s113
    %s133 = sphi 0, %s135
    %s136 = sphi 0, %s133
    %s137 = sphi 0, %s136
    %s153 = sphi 0, %s137
    %s159 = sphi 0, %s161
    %s162 = sphi 0, %s159
    %s163 = sphi 0, %s162
    %s179 = sphi 0, %s163
  $region4: #{trans_net_forward.1} parent=0 // loop_header_branch
    %16 = sbr.rel (%p14) target = $region8
  $region5: #{trans_net_forward.1} parent=0 // loop_body
    %s18 = ssub.s32 %s13, 1
    %s19 = ssub.s32 %s13, 2
    %s20 = sadd.s32 %s13, 1
    %s21 = ssub.s32 %s13, %s20
    %p22 = scmp.eq.s32.totalorder %s21, 0
    %s24 = sadd.s32 %s23, 1
    %s25 = scalar_select %p22, %s23, %s24
    %p28 = pneg %p22
    %p29 = scmp.eq.s32.totalorder %s13, 1
    %p30 = por %p28, %p29
    %p31 = scmp.ne.s32.totalorder %s23, %s26
    %p32 = scmp.eq.s32.totalorder %s13, 0
    %p33 = por %p31, %p32
    %p34 = scmp.ne.s32.totalorder %s23, %s26
    %p35 = scmp.eq.s32.totalorder %s18, 1
    %p36 = por %p34, %p35
    %p37 = scmp.ne.s32.totalorder %s26, %s27
    %p38 = scmp.eq.s32.totalorder %s18, 0
    %p39 = por %p37, %p38
    %p40 = scmp.ne.s32.totalorder %s26, %s27
    %p41 = scmp.eq.s32.totalorder %s19, 1
    %p42 = por %p40, %p41
    %p44 = scmp.ne.s32.totalorder %s27, %s43
    %p45 = scmp.eq.s32.totalorder %s19, 0
    %p46 = por %p44, %p45
    %s48 = sadd.s32 %s47, 1
    %p51 = scmp.eq.s32.totalorder %s13, 1
    %p52 = scmp.ne.s32.totalorder %s47, %s49
    %p53 = scmp.eq.s32.totalorder %s13, 0
    %p54 = por %p52, %p53
    %p55 = scmp.ne.s32.totalorder %s47, %s49
    %p56 = scmp.eq.s32.totalorder %s18, 1
    %p57 = por %p55, %p56
    %p58 = scmp.ne.s32.totalorder %s49, %s50
    %p59 = scmp.eq.s32.totalorder %s18, 0
    %p60 = por %p58, %p59
    %p61 = scmp.ne.s32.totalorder %s49, %s50
    %p62 = scmp.eq.s32.totalorder %s19, 1
    %p63 = por %p61, %p62
    %p65 = scmp.ne.s32.totalorder %s50, %s64
    %p66 = scmp.eq.s32.totalorder %s19, 0
    %p67 = por %p65, %p66
    %s69 = sadd.s32 %s68, 1
    %p72 = scmp.eq.s32.totalorder %s13, 1
    %p73 = scmp.ne.s32.totalorder %s68, %s70
    %p74 = scmp.eq.s32.totalorder %s13, 0
    %p75 = por %p73, %p74
    %p76 = scmp.ne.s32.totalorder %s68, %s70
    %p77 = scmp.eq.s32.totalorder %s18, 1
    %p78 = por %p76, %p77
    %p79 = scmp.ne.s32.totalorder %s70, %s71
    %p80 = scmp.eq.s32.totalorder %s18, 0
    %p81 = por %p79, %p80
    %p82 = scmp.ne.s32.totalorder %s70, %s71
    %p83 = scmp.eq.s32.totalorder %s19, 1
    %p84 = por %p82, %p83
    %p86 = scmp.ne.s32.totalorder %s71, %s85
    %p87 = scmp.eq.s32.totalorder %s19, 0
    %p88 = por %p86, %p87
    %s90 = sadd.s32 %s89, 1
    %p93 = scmp.eq.s32.totalorder %s13, 1
    %p94 = scmp.ne.s32.totalorder %s89, %s91
    %p95 = scmp.eq.s32.totalorder %s13, 0
    %p96 = por %p94, %p95
    %p97 = scmp.ne.s32.totalorder %s89, %s91
    %p98 = scmp.eq.s32.totalorder %s18, 1
    %p99 = por %p97, %p98
    %p100 = scmp.ne.s32.totalorder %s91, %s92
    %p101 = scmp.eq.s32.totalorder %s18, 0
    %p102 = por %p100, %p101
    %p103 = scmp.ne.s32.totalorder %s91, %s92
    %p104 = scmp.eq.s32.totalorder %s19, 1
    %p105 = por %p103, %p104
    %p107 = scmp.ne.s32.totalorder %s92, %s106
    %p108 = scmp.eq.s32.totalorder %s19, 0
    %p109 = por %p107, %p108
    %s111 = sadd.s32 %s110, 1
    %p114 = scmp.eq.s32.totalorder %s13, 1
    %p115 = scmp.ne.s32.totalorder %s110, %s112
    %p116 = scmp.eq.s32.totalorder %s13, 0
    %p117 = por %p115, %p116
    %p118 = scmp.ne.s32.totalorder %s110, %s112
    %p119 = scmp.eq.s32.totalorder %s18, 1
    %p120 = por %p118, %p119
    %p121 = scmp.ne.s32.totalorder %s112, %s113
    %p122 = scmp.eq.s32.totalorder %s18, 0
    %p123 = por %p121, %p122
    %p124 = scmp.ne.s32.totalorder %s112, %s113
    %p125 = scmp.eq.s32.totalorder %s19, 1
    %p126 = por %p124, %p125
    %p128 = scmp.ne.s32.totalorder %s113, %s127
    %p129 = scmp.eq.s32.totalorder %s19, 0
    %p130 = por %p128, %p129
    %s131 = ssub.s32 %s13, %s20
    %p132 = scmp.eq.s32.totalorder %s131, 0
    %s134 = sadd.s32 %s133, 1
    %s135 = scalar_select %p132, %s133, %s134
    %p138 = pneg %p132
    %p139 = scmp.eq.s32.totalorder %s13, 1
    %p140 = por %p138, %p139
    %p141 = scmp.ne.s32.totalorder %s133, %s136
    %p142 = scmp.eq.s32.totalorder %s13, 0
    %p143 = por %p141, %p142
    %p144 = scmp.ne.s32.totalorder %s133, %s136
    %p145 = scmp.eq.s32.totalorder %s18, 1
    %p146 = por %p144, %p145
    %p147 = scmp.ne.s32.totalorder %s136, %s137
    %p148 = scmp.eq.s32.totalorder %s18, 0
    %p149 = por %p147, %p148
    %p150 = scmp.ne.s32.totalorder %s136, %s137
    %p151 = scmp.eq.s32.totalorder %s19, 1
    %p152 = por %p150, %p151
    %p154 = scmp.ne.s32.totalorder %s137, %s153
    %p155 = scmp.eq.s32.totalorder %s19, 0
    %p156 = por %p154, %p155
    %s157 = ssub.s32 %s13, %s20
    %p158 = scmp.eq.s32.totalorder %s157, 0
    %s160 = sadd.s32 %s159, 1
    %s161 = scalar_select %p158, %s159, %s160
    %p164 = pneg %p158
    %p165 = scmp.eq.s32.totalorder %s13, 1
    %p166 = por %p164, %p165
    %p167 = scmp.ne.s32.totalorder %s159, %s162
    %p168 = scmp.eq.s32.totalorder %s13, 0
    %p169 = por %p167, %p168
    %p170 = scmp.ne.s32.totalorder %s159, %s162
    %p171 = scmp.eq.s32.totalorder %s18, 1
    %p172 = por %p170, %p171
    %p173 = scmp.ne.s32.totalorder %s162, %s163
    %p174 = scmp.eq.s32.totalorder %s18, 0
    %p175 = por %p173, %p174
    %p176 = scmp.ne.s32.totalorder %s162, %s163
    %p177 = scmp.eq.s32.totalorder %s19, 1
    %p178 = por %p176, %p177
    %p180 = scmp.ne.s32.totalorder %s163, %s179
    %p181 = scmp.eq.s32.totalorder %s19, 0
    %p182 = por %p180, %p181
    %p183 = scmp.le.s32.totalorder 1, %s13
    %p184 = scmp.lt.s32.totalorder %s13, 3
    %p185 = pnand %p183, %p184
    %p186 = pneg %p185
    // Predicated region
    $region9: #{trans_net_forward.1} parent=5 // pred_check
      _
    $region10: #{trans_net_forward.1} parent=5 // pred_check_branch
      %188 = sbr.rel (%p185) target = $region12
    $region11: #{trans_net_forward.1} parent=5 // pred_region
      %s189 = ssub.s32 %s13, 1
      // Predicated region
      $region13: #{trans_net_forward.1} parent=11 // pred_check
        %p190 = pneg %p60
      $region14: #{trans_net_forward.1} parent=11 // pred_check_branch
        %192 = sbr.rel (%p190) target = $region16
      $region15: #{trans_net_forward.1} parent=11 // pred_region
        _
      $region16: #{trans_net_forward.1} parent=11 // pred_fallthru
        _
      // Predicated region
      $region17: #{trans_net_forward.1} parent=11 // pred_check
        %p193 = pneg %p81
      $region18: #{trans_net_forward.1} parent=11 // pred_check_branch
        %195 = sbr.rel (%p193) target = $region20
      $region19: #{trans_net_forward.1} parent=11 // pred_region
        _
      $region20: #{trans_net_forward.1} parent=11 // pred_fallthru
        _
      // Predicated region
      $region21: #{trans_net_forward.1} parent=11 // pred_check
        %p196 = pneg %p102
      $region22: #{trans_net_forward.1} parent=11 // pred_check_branch
        %198 = sbr.rel (%p196) target = $region24
      $region23: #{trans_net_forward.1} parent=11 // pred_region
        _
      $region24: #{trans_net_forward.1} parent=11 // pred_fallthru
        _
      // Predicated region
      $region25: #{trans_net_forward.1} parent=11 // pred_check
        %p199 = pneg %p123
      $region26: #{trans_net_forward.1} parent=11 // pred_check_branch
        %201 = sbr.rel (%p199) target = $region28
      $region27: #{trans_net_forward.1} parent=11 // pred_region
        _
      $region28: #{trans_net_forward.1} parent=11 // pred_fallthru
        _
    $region12: #{trans_net_forward.1} parent=5 // pred_fallthru
      _
    %p202 = scmp.lt.s32.totalorder %s13, 2
    // Predicated region
    $region29: #{trans_net_forward.1} parent=5 // pred_check
      %p203 = pneg %p202
    $region30: #{trans_net_forward.1} parent=5 // pred_check_branch
      %205 = sbr.rel (%p203) target = $region32
    $region31: #{trans_net_forward.1} parent=5 // pred_region
      // Predicated region
      $region33: #{trans_net_forward.1} parent=31 // pred_check
        %p206 = pneg %p33
      $region34: #{trans_net_forward.1} parent=31 // pred_check_branch
        %208 = sbr.rel (%p206) target = $region36
      $region35: #{trans_net_forward.1} parent=31 // pred_region
        %p209 = scmp.lt.s32.totalorder %s13, 1
        %s210 = scalar_select %p209, %s13, 1
        %s211 = smul.addr %s210, 4
        %s212 = smul.addr %s211, 4
        %s213 = scalar_lea.vmem %s0, %s212
      $region36: #{trans_net_forward.1} parent=31 // pred_fallthru
        _
    $region32: #{trans_net_forward.1} parent=5 // pred_fallthru
      _
    %p214 = scmp.le.s32.totalorder 1, %s13
    %p215 = scmp.lt.s32.totalorder %s13, 3
    %p216 = pnand %p214, %p215
    %p217 = pneg %p216
    // Predicated region
    $region37: #{trans_net_forward.1} parent=5 // pred_check
      _
    $region38: #{trans_net_forward.1} parent=5 // pred_check_branch
      %219 = sbr.rel (%p216) target = $region40
    $region39: #{trans_net_forward.1} parent=5 // pred_region
      %s220 = ssub.s32 %s13, 1
      %p221 = scmp.lt.s32.totalorder %s18, 1
      %s222 = scalar_select %p221, %s18, 1
      %s223 = smul.addr %s222, 4
      %s224 = smul.addr %s223, 4
      %s225 = scalar_lea.vmem %s0, %s224
      %p226 = pneg %p39
      %p227 = pneg %p36
      %p228 = pneg %p60
      %p229 = pneg %p57
      %p230 = pneg %p81
      %p231 = pneg %p78
      %p232 = pneg %p102
      %p233 = pneg %p99
      %p234 = pneg %p123
      %p235 = pneg %p120
      %p236 = pneg %p149
      %p237 = pneg %p146
      %p238 = scmp.lt.s32.totalorder %s18, 1
      %s239 = scalar_select %p238, %s18, 1
      %s240 = smul.addr %s239, 8
      %s241 = smul.addr %s240, 8
      %s242 = scalar_lea.vmem %s5, %s241
      %p243 = pneg %p175
      %p244 = pneg %p172
      %p245 = scmp.lt.s32.totalorder %s18, 1
      %s246 = scalar_select %p245, %s18, 1
      %s247 = smul.addr %s246, 8
      %s248 = smul.addr %s247, 8
      %s249 = scalar_lea.vmem %s6, %s248
      %p250 = scmp.lt.s32.totalorder %s18, 1
      %s251 = scalar_select %p250, %s18, 1
      %s252 = smul.addr %s251, 4
      %s253 = smul.addr %s252, 4
      %s254 = scalar_lea.vmem %s0, %s253
      %p255 = scmp.lt.s32.totalorder %s18, 1
      %s256 = scalar_select %p255, %s18, 1
      %s257 = smul.addr %s256, 8
      %s258 = smul.addr %s257, 8
      %s259 = scalar_lea.vmem %s5, %s258
      %p260 = scmp.lt.s32.totalorder %s18, 1
      %s261 = scalar_select %p260, %s18, 1
      %s262 = smul.addr %s261, 8
      %s263 = smul.addr %s262, 8
      %s264 = scalar_lea.vmem %s6, %s263
      %v266 = vld [vmem:[%s1] sm:$0xf]
      %v267 = vld [vmem:[%s1 + $0x4] sm:$0xf]
      %v268 = vld [vmem:[%s2] sm:$0xff]
      %v269 = vld [vmem:[%s2 + $0x8] sm:$0xff]
      %v270 = vld [vmem:[%s3] sm:$0xf]
      %v271 = vld [vmem:[%s4] sm:$0xff]
      %v272 = vld [vmem:[%s4 + $0x8] sm:$0xff]
      %v273 = vld [vmem:[%s4 + $0x10] sm:$0xff]
      %v274 = vld [vmem:[%s4 + $0x18] sm:$0xff]
      %v275 = vld [vmem:[%s4 + $0x20] sm:$0xff]
      %s276 = scalar_lea.vmem %s1, 8
      %v277 = vld [vmem:[%s276] sm:$0xf]
      %v278 = vld [vmem:[%s276 + $0x4] sm:$0xf]
      %s279 = scalar_lea.vmem %s2, 16
      %v280 = vld [vmem:[%s279] sm:$0xff]
      %v281 = vld [vmem:[%s279 + $0x8] sm:$0xff]
      %s282 = scalar_lea.vmem %s3, 4
      %v283 = vld [vmem:[%s282] sm:$0xf]
      %s284 = scalar_lea.vmem %s4, 40
      %v285 = vld [vmem:[%s284] sm:$0xff]
      %v286 = vld [vmem:[%s284 + $0x8] sm:$0xff]
      %v287 = vld [vmem:[%s284 + $0x10] sm:$0xff]
      %v288 = vld [vmem:[%s284 + $0x18] sm:$0xff]
      %v289 = vld [vmem:[%s284 + $0x20] sm:$0xff]
      %v290 = vld [vmem:[%s254] sm:$0xff]
      %s291 = scalar_lea.vmem %s254, 8
      %v292 = vld [vmem:[%s291] sm:$0xff]
      %294 = vset.pattern.permute.xlu0 0
      %295 = vperm.xlu0 %294, %v271
      %v296 = vpop.permute.xlu0 %295
      %299 = vset.pattern.permute.xlu0 0
      %300 = vperm.xlu0 %299, %v272
      %v301 = vpop.permute.xlu0 %300
      %v305 = vunpack.c.l.b16 %v266
      %v306 = vunpack.c.l.b16 %v267
      %v307 = vpack.c.b16 %v306, %v305
      %v309 = vunpack.c.l.b16 %v290
      %v310 = vunpack.c.h.b16 %v290
      %v311 = vpack.c.b16 %v309, %v309
      %v312 = vpack.c.b16 %v310, %v310
      %vm313 = vcmask 64512
      %v315 = vsel %vm313, %v307, 0
      %vm317 = vcmask 1043456
      %v319 = vsel %vm317, %v311, 0
      %v322 = vsel %vm317, %v312, 0
      %324 = vmatprep.subr.bf16.mxu0 %v322
      %325 = vmatpush1.bf16.msra.mxu0 %v319
      %326 = vmatprep.subr.bf16.mxu0 0
      %327 = vmatpush1.bf16.msra.mxu0 0
      %328 = vmatprep.subr.bf16.mxu0 0
      %329 = vmatpush1.bf16.msra.mxu0 0
      %330 = vmatprep.subr.bf16.mxu0 0
      %331 = vmatpush1.bf16.msra.mxu0 0
      %332 = vmatprep.subr.bf16.mxu0 0
      %333 = vmatpush1.bf16.msra.mxu0 0
      %334 = vmatprep.subr.bf16.mxu0 0
      %335 = vmatpush1.bf16.msra.mxu0 0
      %336 = vmatprep.subr.bf16.mxu0 0
      %337 = vmatpush1.bf16.msra.mxu0 0
      %338 = vmatprep.subr.bf16.mxu0 0
      %339 = vmatpush1.bf16.msra.mxu0 0
      %340 = vmatprep.subr.bf16.mxu0 0
      %341 = vmatpush1.bf16.msra.mxu0 0
      %342 = vmatprep.subr.bf16.mxu0 0
      %343 = vmatpush1.bf16.msra.mxu0 0
      %344 = vmatprep.subr.bf16.mxu0 0
      %345 = vmatpush1.bf16.msra.mxu0 0
      %346 = vmatprep.subr.bf16.mxu0 0
      %347 = vmatpush1.bf16.msra.mxu0 0
      %348 = vmatprep.subr.bf16.mxu0 0
      %349 = vmatpush1.bf16.msra.mxu0 0
      %350 = vmatprep.subr.bf16.mxu0 0
      %351 = vmatpush1.bf16.msra.mxu0 0
      %352 = vmatprep.subr.bf16.mxu0 0
      %353 = vmatpush1.bf16.msra.mxu0 0
      %354 = vmatprep.subr.bf16.mxu0 0
      %355 = vmatpush1.bf16.msra.mxu0 0
      %356 = vmatprep.mubr.bf16.mxu0 0
      %357 = vmatmul.mubr.bf16.gmra.mrb[0].mxu0 %v315
      %v358 = vpop.f32.mrb[0].mxu0
      %v359 = vadd.f32 %v296, %v358
      %v360 = vpop.f32.mrb[0].mxu0
      %v361 = vadd.f32 %v296, %v360
      %v362 = vpop.f32.mrb[0].mxu0
      %v363 = vadd.f32 %v301, %v362
      %v364 = vpop.f32.mrb[0].mxu0
      %v365 = vadd.f32 %v301, %v364
      %366 = vdwg.mxu0
      %v367 = vmax.f32 %v359, 0.0
      %v368 = vmax.f32 %v361, 0.0
      %v369 = vadd.f32 %v363, %v365
      %370 = vadd.xlane.f32.xlu0 %v369
      %v371 = vpop.xlane.xlu0 %370
      %v372 = vrcp.pop 256.0
      %v373 = vmul.f32 %v371, %v372
      %v374 = vtanh.pop %v373
      %376 = vset.pattern.permute.xlu0 0
      %377 = vperm.xlu0 %376, %v285
      %v378 = vpop.permute.xlu0 %377
      %381 = vset.pattern.permute.xlu0 0
      %382 = vperm.xlu0 %381, %v286
      %v383 = vpop.permute.xlu0 %382
      %v387 = vunpack.c.l.b16 %v277
      %v388 = vunpack.c.l.b16 %v278
      %v389 = vpack.c.b16 %v388, %v387
      %v391 = vunpack.c.l.b16 %v292
      %v392 = vunpack.c.h.b16 %v292
      %v393 = vpack.c.b16 %v391, %v391
      %v394 = vpack.c.b16 %v392, %v392
      %v396 = vsel %vm313, %v389, 0
      %v399 = vsel %vm317, %v393, 0
      %v402 = vsel %vm317, %v394, 0
      %404 = vmatprep.subr.bf16.mxu0 %v402
      %405 = vmatpush1.bf16.msra.mxu0 %v399
      %406 = vmatprep.subr.bf16.mxu0 0
      %407 = vmatpush1.bf16.msra.mxu0 0
      %408 = vmatprep.subr.bf16.mxu0 0
      %409 = vmatpush1.bf16.msra.mxu0 0
      %410 = vmatprep.subr.bf16.mxu0 0
      %411 = vmatpush1.bf16.msra.mxu0 0
      %412 = vmatprep.subr.bf16.mxu0 0
      %413 = vmatpush1.bf16.msra.mxu0 0
      %414 = vmatprep.subr.bf16.mxu0 0
      %415 = vmatpush1.bf16.msra.mxu0 0
      %416 = vmatprep.subr.bf16.mxu0 0
      %417 = vmatpush1.bf16.msra.mxu0 0
      %418 = vmatprep.subr.bf16.mxu0 0
      %419 = vmatpush1.bf16.msra.mxu0 0
      %420 = vmatprep.subr.bf16.mxu0 0
      %421 = vmatpush1.bf16.msra.mxu0 0
      %422 = vmatprep.subr.bf16.mxu0 0
      %423 = vmatpush1.bf16.msra.mxu0 0
      %424 = vmatprep.subr.bf16.mxu0 0
      %425 = vmatpush1.bf16.msra.mxu0 0
      %426 = vmatprep.subr.bf16.mxu0 0
      %427 = vmatpush1.bf16.msra.mxu0 0
      %428 = vmatprep.subr.bf16.mxu0 0
      %429 = vmatpush1.bf16.msra.mxu0 0
      %430 = vmatprep.subr.bf16.mxu0 0
      %431 = vmatpush1.bf16.msra.mxu0 0
      %432 = vmatprep.subr.bf16.mxu0 0
      %433 = vmatpush1.bf16.msra.mxu0 0
      %434 = vmatprep.subr.bf16.mxu0 0
      %435 = vmatpush1.bf16.msra.mxu0 0
      %436 = vmatprep.mubr.bf16.mxu0 0
      %437 = vmatmul.mubr.bf16.gmra.mrb[0].mxu0 %v396
      %v438 = vpop.f32.mrb[0].mxu0
      %v439 = vadd.f32 %v378, %v438
      %v440 = vpop.f32.mrb[0].mxu0
      %v441 = vadd.f32 %v378, %v440
      %v442 = vpop.f32.mrb[0].mxu0
      %v443 = vadd.f32 %v383, %v442
      %v444 = vpop.f32.mrb[0].mxu0
      %v445 = vadd.f32 %v383, %v444
      %446 = vdwg.mxu0
      %v447 = vmax.f32 %v439, 0.0
      %v448 = vmax.f32 %v441, 0.0
      %v449 = vadd.f32 %v443, %v445
      %450 = vadd.xlane.f32.xlu0 %v449
      %v451 = vpop.xlane.xlu0 %450
      %v452 = vmul.f32 %v451, %v372
      %v453 = vtanh.pop %v452
      %v455 = vsel %vm313, %v268, 0
      %v458 = vsel %vm313, %v269, 0
      %460 = vmatprep.subr.mxu0 0.0
      %461 = vmatpush1.msra.mxu0 %v374
      %462 = vmatprep.subr.mxu0 0.0
      %463 = vmatpush1.msra.mxu0 0.0
      %464 = vmatprep.subr.mxu0 0.0
      %465 = vmatpush1.msra.mxu0 0.0
      %466 = vmatprep.subr.mxu0 0.0
      %467 = vmatpush1.msra.mxu0 0.0
      %468 = vmatprep.subr.mxu0 0.0
      %469 = vmatpush1.msra.mxu0 0.0
      %470 = vmatprep.subr.mxu0 0.0
      %471 = vmatpush1.msra.mxu0 0.0
      %472 = vmatprep.subr.mxu0 0.0
      %473 = vmatpush1.msra.mxu0 0.0
      %474 = vmatprep.subr.mxu0 0.0
      %475 = vmatpush1.msra.mxu0 0.0
      %476 = vmatprep.subr.mxu0 0.0
      %477 = vmatpush1.msra.mxu0 0.0
      %478 = vmatprep.subr.mxu0 0.0
      %479 = vmatpush1.msra.mxu0 0.0
      %480 = vmatprep.subr.mxu0 0.0
      %481 = vmatpush1.msra.mxu0 0.0
      %482 = vmatprep.subr.mxu0 0.0
      %483 = vmatpush1.msra.mxu0 0.0
      %484 = vmatprep.subr.mxu0 0.0
      %485 = vmatpush1.msra.mxu0 0.0
      %486 = vmatprep.subr.mxu0 0.0
      %487 = vmatpush1.msra.mxu0 0.0
      %488 = vmatprep.subr.mxu0 0.0
      %489 = vmatpush1.msra.mxu0 0.0
      %490 = vmatprep.subr.mxu0 0.0
      %491 = vmatpush1.msra.mxu0 0.0
      %492 = vmatprep.subr.mxu0 0.0
      %493 = vmatpush1.msra.mxu0 0.0
      %494 = vmatprep.subr.mxu0 0.0
      %495 = vmatpush1.msra.mxu0 0.0
      %496 = vmatprep.subr.mxu0 0.0
      %497 = vmatpush1.msra.mxu0 0.0
      %498 = vmatprep.subr.mxu0 0.0
      %499 = vmatpush1.msra.mxu0 0.0
      %500 = vmatprep.subr.mxu0 0.0
      %501 = vmatpush1.msra.mxu0 0.0
      %502 = vmatprep.subr.mxu0 0.0
      %503 = vmatpush1.msra.mxu0 0.0
      %504 = vmatprep.subr.mxu0 0.0
      %505 = vmatpush1.msra.mxu0 0.0
      %506 = vmatprep.subr.mxu0 0.0
      %507 = vmatpush1.msra.mxu0 0.0
      %508 = vmatprep.subr.mxu0 0.0
      %509 = vmatpush1.msra.mxu0 0.0
      %510 = vmatprep.subr.mxu0 0.0
      %511 = vmatpush1.msra.mxu0 0.0
      %512 = vmatprep.subr.mxu0 0.0
      %513 = vmatpush1.msra.mxu0 0.0
      %514 = vmatprep.subr.mxu0 0.0
      %515 = vmatpush1.msra.mxu0 0.0
      %516 = vmatprep.subr.mxu0 0.0
      %517 = vmatpush1.msra.mxu0 0.0
      %518 = vmatprep.subr.mxu0 0.0
      %519 = vmatpush1.msra.mxu0 0.0
      %520 = vmatprep.subr.mxu0 0.0
      %521 = vmatpush1.msra.mxu0 0.0
      %522 = vmatprep.subr.mxu0 0.0
      %523 = vmatpush1.msra.mxu0 0.0
      %524 = vmatprep.mubr.f32.mxu0 0.0
      %525 = vmatmul.mubr.f32.gmra.mrb[0].mxu0 %v455
      %v526 = vpop.f32.mrb[0].mxu0
      %v527 = vadd.f32 %v273, %v526
      %v528 = vpop.f32.mrb[0].mxu0
      %529 = vmatprep.mubr.f32.mxu0 0.0
      %530 = vmatmul.mubr.f32.gmra.mrb[0].mxu0 %v458
      %v531 = vpop.f32.mrb[0].mxu0
      %v532 = vadd.f32 %v274, %v531
      %v533 = vpop.f32.mrb[0].mxu0
      %534 = vdwg.mxu0
      %v536 = vsel %vm313, %v280, 0
      %v539 = vsel %vm313, %v281, 0
      %541 = vmatprep.subr.mxu0 0.0
      %542 = vmatpush1.msra.mxu0 %v453
      %543 = vmatprep.subr.mxu0 0.0
      %544 = vmatpush1.msra.mxu0 0.0
      %545 = vmatprep.subr.mxu0 0.0
      %546 = vmatpush1.msra.mxu0 0.0
      %547 = vmatprep.subr.mxu0 0.0
      %548 = vmatpush1.msra.mxu0 0.0
      %549 = vmatprep.subr.mxu0 0.0
      %550 = vmatpush1.msra.mxu0 0.0
      %551 = vmatprep.subr.mxu0 0.0
      %552 = vmatpush1.msra.mxu0 0.0
      %553 = vmatprep.subr.mxu0 0.0
      %554 = vmatpush1.msra.mxu0 0.0
      %555 = vmatprep.subr.mxu0 0.0
      %556 = vmatpush1.msra.mxu0 0.0
      %557 = vmatprep.subr.mxu0 0.0
      %558 = vmatpush1.msra.mxu0 0.0
      %559 = vmatprep.subr.mxu0 0.0
      %560 = vmatpush1.msra.mxu0 0.0
      %561 = vmatprep.subr.mxu0 0.0
      %562 = vmatpush1.msra.mxu0 0.0
      %563 = vmatprep.subr.mxu0 0.0
      %564 = vmatpush1.msra.mxu0 0.0
      %565 = vmatprep.subr.mxu0 0.0
      %566 = vmatpush1.msra.mxu0 0.0
      %567 = vmatprep.subr.mxu0 0.0
      %568 = vmatpush1.msra.mxu0 0.0
      %569 = vmatprep.subr.mxu0 0.0
      %570 = vmatpush1.msra.mxu0 0.0
      %571 = vmatprep.subr.mxu0 0.0
      %572 = vmatpush1.msra.mxu0 0.0
      %573 = vmatprep.subr.mxu0 0.0
      %574 = vmatpush1.msra.mxu0 0.0
      %575 = vmatprep.subr.mxu0 0.0
      %576 = vmatpush1.msra.mxu0 0.0
      %577 = vmatprep.subr.mxu0 0.0
      %578 = vmatpush1.msra.mxu0 0.0
      %579 = vmatprep.subr.mxu0 0.0
      %580 = vmatpush1.msra.mxu0 0.0
      %581 = vmatprep.subr.mxu0 0.0
      %582 = vmatpush1.msra.mxu0 0.0
      %583 = vmatprep.subr.mxu0 0.0
      %584 = vmatpush1.msra.mxu0 0.0
      %585 = vmatprep.subr.mxu0 0.0
      %586 = vmatpush1.msra.mxu0 0.0
      %587 = vmatprep.subr.mxu0 0.0
      %588 = vmatpush1.msra.mxu0 0.0
      %589 = vmatprep.subr.mxu0 0.0
      %590 = vmatpush1.msra.mxu0 0.0
      %591 = vmatprep.subr.mxu0 0.0
      %592 = vmatpush1.msra.mxu0 0.0
      %593 = vmatprep.subr.mxu0 0.0
      %594 = vmatpush1.msra.mxu0 0.0
      %595 = vmatprep.subr.mxu0 0.0
      %596 = vmatpush1.msra.mxu0 0.0
      %597 = vmatprep.subr.mxu0 0.0
      %598 = vmatpush1.msra.mxu0 0.0
      %599 = vmatprep.subr.mxu0 0.0
      %600 = vmatpush1.msra.mxu0 0.0
      %601 = vmatprep.subr.mxu0 0.0
      %602 = vmatpush1.msra.mxu0 0.0
      %603 = vmatprep.subr.mxu0 0.0
      %604 = vmatpush1.msra.mxu0 0.0
      %605 = vmatprep.mubr.f32.mxu0 0.0
      %606 = vmatmul.mubr.f32.gmra.mrb[0].mxu0 %v536
      %v607 = vpop.f32.mrb[0].mxu0
      %v608 = vadd.f32 %v287, %v607
      %v609 = vpop.f32.mrb[0].mxu0
      %610 = vmatprep.mubr.f32.mxu0 0.0
      %611 = vmatmul.mubr.f32.gmra.mrb[0].mxu0 %v539
      %v612 = vpop.f32.mrb[0].mxu0
      %v613 = vadd.f32 %v288, %v612
      %v614 = vpop.f32.mrb[0].mxu0
      %615 = vdwg.mxu0
      %617 = vset.pattern.permute.xlu0 0
      %618 = vperm.xlu0 %617, %v527
      %v619 = vpop.permute.xlu0 %618
      %v621 = vmul.f32 %v619, %v447
      %v622 = vmul.f32 %v619, %v448
      %v623 = vmul.f32 %v619, %v367
      %v624 = vmul.f32 %v619, %v368
      %626 = vset.pattern.permute.xlu0 0
      %627 = vperm.xlu0 %626, %v532
      %v628 = vpop.permute.xlu0 %627
      %v630 = vadd.f32 %v621, %v628
      %v631 = vadd.f32 %v622, %v628
      %v632 = vadd.f32 %v623, %v628
      %v633 = vadd.f32 %v624, %v628
      %v634 = vmax.f32 %v630, 0.0
      %v635 = vmax.f32 %v631, 0.0
      %v636 = vmax.f32 %v632, 0.0
      %v637 = vmax.f32 %v633, 0.0
      %v638 = vpack.c.bf16 %v634, %v634
      %v639 = vpack.c.bf16 %v635, %v635
      %v640 = vpack.c.bf16 %v636, %v636
      %v641 = vpack.c.bf16 %v637, %v637
      %643 = vset.pattern.permute.xlu0 0
      %644 = vperm.xlu0 %643, %v275
      %v645 = vpop.permute.xlu0 %644
      %v648 = vsel %vm313, %v270, 0
      %v651 = vsel %vm317, %v638, 0
      %v654 = vsel %vm317, %v639, 0
      %v657 = vsel %vm317, %v640, 0
      %v660 = vsel %vm317, %v641, 0
      %662 = vmatprep.subr.bf16.mxu0 %v654
      %663 = vmatpush1.bf16.msra.mxu0 %v651
      %664 = vmatprep.subr.bf16.mxu0 0
      %665 = vmatpush1.bf16.msra.mxu0 0
      %666 = vmatprep.subr.bf16.mxu0 0
      %667 = vmatpush1.bf16.msra.mxu0 0
      %668 = vmatprep.subr.bf16.mxu0 0
      %669 = vmatpush1.bf16.msra.mxu0 0
      %670 = vmatprep.subr.bf16.mxu0 0
      %671 = vmatpush1.bf16.msra.mxu0 0
      %672 = vmatprep.subr.bf16.mxu0 0
      %673 = vmatpush1.bf16.msra.mxu0 0
      %674 = vmatprep.subr.bf16.mxu0 0
      %675 = vmatpush1.bf16.msra.mxu0 0
      %676 = vmatprep.subr.bf16.mxu0 0
      %677 = vmatpush1.bf16.msra.mxu0 0
      %678 = vmatprep.subr.bf16.mxu0 0
      %679 = vmatpush1.bf16.msra.mxu0 0
      %680 = vmatprep.subr.bf16.mxu0 0
      %681 = vmatpush1.bf16.msra.mxu0 0
      %682 = vmatprep.subr.bf16.mxu0 0
      %683 = vmatpush1.bf16.msra.mxu0 0
      %684 = vmatprep.subr.bf16.mxu0 0
      %685 = vmatpush1.bf16.msra.mxu0 0
      %686 = vmatprep.subr.bf16.mxu0 0
      %687 = vmatpush1.bf16.msra.mxu0 0
      %688 = vmatprep.subr.bf16.mxu0 0
      %689 = vmatpush1.bf16.msra.mxu0 0
      %690 = vmatprep.subr.bf16.mxu0 0
      %691 = vmatpush1.bf16.msra.mxu0 0
      %692 = vmatprep.subr.bf16.mxu0 0
      %693 = vmatpush1.bf16.msra.mxu0 0
      %694 = vmatprep.mubr.bf16.mxu0 0
      %695 = vmatmul.mubr.bf16.gmra.mrb[0].mxu0 %v648
      %v696 = vpop.f32.mrb[0].mxu0
      %v697 = vadd.f32 %v645, %v696
      %v698 = vpop.f32.mrb[0].mxu0
      %v699 = vadd.f32 %v645, %v698
      %v700 = vpop.f32.mrb[0].mxu0
      %v701 = vpop.f32.mrb[0].mxu0
      %702 = vdwg.mxu0
      %703 = vmatprep.subr.bf16.mxu0 %v660
      %704 = vmatpush1.bf16.msra.mxu0 %v657
      %705 = vmatprep.subr.bf16.mxu0 0
      %706 = vmatpush1.bf16.msra.mxu0 0
      %707 = vmatprep.subr.bf16.mxu0 0
      %708 = vmatpush1.bf16.msra.mxu0 0
      %709 = vmatprep.subr.bf16.mxu0 0
      %710 = vmatpush1.bf16.msra.mxu0 0
      %711 = vmatprep.subr.bf16.mxu0 0
      %712 = vmatpush1.bf16.msra.mxu0 0
      %713 = vmatprep.subr.bf16.mxu0 0
      %714 = vmatpush1.bf16.msra.mxu0 0
      %715 = vmatprep.subr.bf16.mxu0 0
      %716 = vmatpush1.bf16.msra.mxu0 0
      %717 = vmatprep.subr.bf16.mxu0 0
      %718 = vmatpush1.bf16.msra.mxu0 0
      %719 = vmatprep.subr.bf16.mxu0 0
      %720 = vmatpush1.bf16.msra.mxu0 0
      %721 = vmatprep.subr.bf16.mxu0 0
      %722 = vmatpush1.bf16.msra.mxu0 0
      %723 = vmatprep.subr.bf16.mxu0 0
      %724 = vmatpush1.bf16.msra.mxu0 0
      %725 = vmatprep.subr.bf16.mxu0 0
      %726 = vmatpush1.bf16.msra.mxu0 0
      %727 = vmatprep.subr.bf16.mxu0 0
      %728 = vmatpush1.bf16.msra.mxu0 0
      %729 = vmatprep.subr.bf16.mxu0 0
      %730 = vmatpush1.bf16.msra.mxu0 0
      %731 = vmatprep.subr.bf16.mxu0 0
      %732 = vmatpush1.bf16.msra.mxu0 0
      %733 = vmatprep.subr.bf16.mxu0 0
      %734 = vmatpush1.bf16.msra.mxu0 0
      %735 = vmatprep.mubr.bf16.mxu0 0
      %736 = vmatmul.mubr.bf16.gmra.mrb[0].mxu0 %v648
      %v737 = vpop.f32.mrb[0].mxu0
      %v738 = vadd.f32 %v645, %v737
      %v739 = vpop.f32.mrb[0].mxu0
      %v740 = vadd.f32 %v645, %v739
      %v741 = vpop.f32.mrb[0].mxu0
      %v742 = vpop.f32.mrb[0].mxu0
      %743 = vdwg.mxu0
      %v744 = vtanh.pop %v697
      %v745 = vtanh.pop %v699
      %v746 = vtanh.pop %v738
      %v747 = vtanh.pop %v740
      %749 = vset.pattern.permute.xlu0 0
      %750 = vperm.xlu0 %749, %v608
      %v751 = vpop.permute.xlu0 %750
      %v753 = vmul.f32 %v751, %v367
      %v754 = vmul.f32 %v751, %v368
      %v755 = vmul.f32 %v751, %v447
      %v756 = vmul.f32 %v751, %v448
      %758 = vset.pattern.permute.xlu0 0
      %759 = vperm.xlu0 %758, %v613
      %v760 = vpop.permute.xlu0 %759
      %v762 = vadd.f32 %v753, %v760
      %v763 = vadd.f32 %v754, %v760
      %v764 = vadd.f32 %v755, %v760
      %v765 = vadd.f32 %v756, %v760
      %v766 = vmax.f32 %v762, 0.0
      %v767 = vmax.f32 %v763, 0.0
      %v768 = vmax.f32 %v764, 0.0
      %v769 = vmax.f32 %v765, 0.0
      %v770 = vpack.c.bf16 %v766, %v766
      %v771 = vpack.c.bf16 %v767, %v767
      %v772 = vpack.c.bf16 %v768, %v768
      %v773 = vpack.c.bf16 %v769, %v769
      %775 = vset.pattern.permute.xlu0 0
      %776 = vperm.xlu0 %775, %v289
      %v777 = vpop.permute.xlu0 %776
      %v780 = vsel %vm313, %v283, 0
      %v783 = vsel %vm317, %v770, 0
      %v786 = vsel %vm317, %v771, 0
      %v789 = vsel %vm317, %v772, 0
      %v792 = vsel %vm317, %v773, 0
      %794 = vmatprep.subr.bf16.mxu0 %v786
      %795 = vmatpush1.bf16.msra.mxu0 %v783
      %796 = vmatprep.subr.bf16.mxu0 0
      %797 = vmatpush1.bf16.msra.mxu0 0
      %798 = vmatprep.subr.bf16.mxu0 0
      %799 = vmatpush1.bf16.msra.mxu0 0
      %800 = vmatprep.subr.bf16.mxu0 0
      %801 = vmatpush1.bf16.msra.mxu0 0
      %802 = vmatprep.subr.bf16.mxu0 0
      %803 = vmatpush1.bf16.msra.mxu0 0
      %804 = vmatprep.subr.bf16.mxu0 0
      %805 = vmatpush1.bf16.msra.mxu0 0
      %806 = vmatprep.subr.bf16.mxu0 0
      %807 = vmatpush1.bf16.msra.mxu0 0
      %808 = vmatprep.subr.bf16.mxu0 0
      %809 = vmatpush1.bf16.msra.mxu0 0
      %810 = vmatprep.subr.bf16.mxu0 0
      %811 = vmatpush1.bf16.msra.mxu0 0
      %812 = vmatprep.subr.bf16.mxu0 0
      %813 = vmatpush1.bf16.msra.mxu0 0
      %814 = vmatprep.subr.bf16.mxu0 0
      %815 = vmatpush1.bf16.msra.mxu0 0
      %816 = vmatprep.subr.bf16.mxu0 0
      %817 = vmatpush1.bf16.msra.mxu0 0
      %818 = vmatprep.subr.bf16.mxu0 0
      %819 = vmatpush1.bf16.msra.mxu0 0
      %820 = vmatprep.subr.bf16.mxu0 0
      %821 = vmatpush1.bf16.msra.mxu0 0
      %822 = vmatprep.subr.bf16.mxu0 0
      %823 = vmatpush1.bf16.msra.mxu0 0
      %824 = vmatprep.subr.bf16.mxu0 0
      %825 = vmatpush1.bf16.msra.mxu0 0
      %826 = vmatprep.mubr.bf16.mxu0 0
      %827 = vmatmul.mubr.bf16.gmra.mrb[0].mxu0 %v780
      %v828 = vpop.f32.mrb[0].mxu0
      %v829 = vadd.f32 %v777, %v828
      %v830 = vpop.f32.mrb[0].mxu0
      %v831 = vadd.f32 %v777, %v830
      %v832 = vpop.f32.mrb[0].mxu0
      %v833 = vpop.f32.mrb[0].mxu0
      %834 = vdwg.mxu0
      %835 = vmatprep.subr.bf16.mxu0 %v792
      %836 = vmatpush1.bf16.msra.mxu0 %v789
      %837 = vmatprep.subr.bf16.mxu0 0
      %838 = vmatpush1.bf16.msra.mxu0 0
      %839 = vmatprep.subr.bf16.mxu0 0
      %840 = vmatpush1.bf16.msra.mxu0 0
      %841 = vmatprep.subr.bf16.mxu0 0
      %842 = vmatpush1.bf16.msra.mxu0 0
      %843 = vmatprep.subr.bf16.mxu0 0
      %844 = vmatpush1.bf16.msra.mxu0 0
      %845 = vmatprep.subr.bf16.mxu0 0
      %846 = vmatpush1.bf16.msra.mxu0 0
      %847 = vmatprep.subr.bf16.mxu0 0
      %848 = vmatpush1.bf16.msra.mxu0 0
      %849 = vmatprep.subr.bf16.mxu0 0
      %850 = vmatpush1.bf16.msra.mxu0 0
      %851 = vmatprep.subr.bf16.mxu0 0
      %852 = vmatpush1.bf16.msra.mxu0 0
      %853 = vmatprep.subr.bf16.mxu0 0
      %854 = vmatpush1.bf16.msra.mxu0 0
      %855 = vmatprep.subr.bf16.mxu0 0
      %856 = vmatpush1.bf16.msra.mxu0 0
      %857 = vmatprep.subr.bf16.mxu0 0
      %858 = vmatpush1.bf16.msra.mxu0 0
      %859 = vmatprep.subr.bf16.mxu0 0
      %860 = vmatpush1.bf16.msra.mxu0 0
      %861 = vmatprep.subr.bf16.mxu0 0
      %862 = vmatpush1.bf16.msra.mxu0 0
      %863 = vmatprep.subr.bf16.mxu0 0
      %864 = vmatpush1.bf16.msra.mxu0 0
      %865 = vmatprep.subr.bf16.mxu0 0
      %866 = vmatpush1.bf16.msra.mxu0 0
      %867 = vmatprep.mubr.bf16.mxu0 0
      %868 = vmatmul.mubr.bf16.gmra.mrb[0].mxu0 %v780
      %v869 = vpop.f32.mrb[0].mxu0
      %v870 = vadd.f32 %v777, %v869
      %v871 = vpop.f32.mrb[0].mxu0
      %v872 = vadd.f32 %v777, %v871
      %v873 = vpop.f32.mrb[0].mxu0
      %v874 = vpop.f32.mrb[0].mxu0
      %875 = vdwg.mxu0
      %v876 = vtanh.pop %v829
      %v877 = vtanh.pop %v831
      %v878 = vtanh.pop %v870
      %v879 = vtanh.pop %v872
      %v880 = vpack.c.bf16 %v744, %v744
      %v881 = vpack.c.bf16 %v745, %v745
      %v883 = vsel %vm317, %v880, 0
      %v886 = vsel %vm317, %v881, 0
      %888 = vmatprep.subr.bf16.mxu0 %v886
      %889 = vmatpush1.bf16.msra.mxu0 %v883
      %890 = vmatprep.subr.bf16.mxu0 0
      %891 = vmatpush1.bf16.msra.mxu0 0
      %892 = vmatprep.subr.bf16.mxu0 0
      %893 = vmatpush1.bf16.msra.mxu0 0
      %894 = vmatprep.subr.bf16.mxu0 0
      %895 = vmatpush1.bf16.msra.mxu0 0
      %896 = vmatprep.subr.bf16.mxu0 0
      %897 = vmatpush1.bf16.msra.mxu0 0
      %898 = vmatprep.subr.bf16.mxu0 0
      %899 = vmatpush1.bf16.msra.mxu0 0
      %900 = vmatprep.subr.bf16.mxu0 0
      %901 = vmatpush1.bf16.msra.mxu0 0
      %902 = vmatprep.subr.bf16.mxu0 0
      %903 = vmatpush1.bf16.msra.mxu0 0
      %904 = vmatprep.subr.bf16.mxu0 0
      %905 = vmatpush1.bf16.msra.mxu0 0
      %906 = vmatprep.subr.bf16.mxu0 0
      %907 = vmatpush1.bf16.msra.mxu0 0
      %908 = vmatprep.subr.bf16.mxu0 0
      %909 = vmatpush1.bf16.msra.mxu0 0
      %910 = vmatprep.subr.bf16.mxu0 0
      %911 = vmatpush1.bf16.msra.mxu0 0
      %912 = vmatprep.subr.bf16.mxu0 0
      %913 = vmatpush1.bf16.msra.mxu0 0
      %914 = vmatprep.subr.bf16.mxu0 0
      %915 = vmatpush1.bf16.msra.mxu0 0
      %916 = vmatprep.subr.bf16.mxu0 0
      %917 = vmatpush1.bf16.msra.mxu0 0
      %918 = vmatprep.subr.bf16.mxu0 0
      %919 = vmatpush1.bf16.msra.mxu0 0
      %920 = vmatprep.mubr.bf16.mxu0 0
      %921 = vmatmul.mubr.bf16.gmra.mrb[0].mxu0 %v315
      %v922 = vpop.f32.mrb[0].mxu0
      %v923 = vadd.f32 0.0, %v922
      %v924 = vpop.f32.mrb[0].mxu0
      %v925 = vadd.f32 0.0, %v924
      %v926 = vpop.f32.mrb[0].mxu0
      %v927 = vpop.f32.mrb[0].mxu0
      %928 = vdwg.mxu0
      %v929 = vadd.f32 %v923, %v296
      %v930 = vadd.f32 %v925, %v296
      %v931 = vmax.f32 %v929, 0.0
      %v932 = vmax.f32 %v930, 0.0
      %v933 = vpack.c.bf16 %v876, %v876
      %v934 = vpack.c.bf16 %v877, %v877
      %v936 = vsel %vm317, %v933, 0
      %v939 = vsel %vm317, %v934, 0
      %941 = vmatprep.subr.bf16.mxu0 %v939
      %942 = vmatpush1.bf16.msra.mxu0 %v936
      %943 = vmatprep.subr.bf16.mxu0 0
      %944 = vmatpush1.bf16.msra.mxu0 0
      %945 = vmatprep.subr.bf16.mxu0 0
      %946 = vmatpush1.bf16.msra.mxu0 0
      %947 = vmatprep.subr.bf16.mxu0 0
      %948 = vmatpush1.bf16.msra.mxu0 0
      %949 = vmatprep.subr.bf16.mxu0 0
      %950 = vmatpush1.bf16.msra.mxu0 0
      %951 = vmatprep.subr.bf16.mxu0 0
      %952 = vmatpush1.bf16.msra.mxu0 0
      %953 = vmatprep.subr.bf16.mxu0 0
      %954 = vmatpush1.bf16.msra.mxu0 0
      %955 = vmatprep.subr.bf16.mxu0 0
      %956 = vmatpush1.bf16.msra.mxu0 0
      %957 = vmatprep.subr.bf16.mxu0 0
      %958 = vmatpush1.bf16.msra.mxu0 0
      %959 = vmatprep.subr.bf16.mxu0 0
      %960 = vmatpush1.bf16.msra.mxu0 0
      %961 = vmatprep.subr.bf16.mxu0 0
      %962 = vmatpush1.bf16.msra.mxu0 0
      %963 = vmatprep.subr.bf16.mxu0 0
      %964 = vmatpush1.bf16.msra.mxu0 0
      %965 = vmatprep.subr.bf16.mxu0 0
      %966 = vmatpush1.bf16.msra.mxu0 0
      %967 = vmatprep.subr.bf16.mxu0 0
      %968 = vmatpush1.bf16.msra.mxu0 0
      %969 = vmatprep.subr.bf16.mxu0 0
      %970 = vmatpush1.bf16.msra.mxu0 0
      %971 = vmatprep.subr.bf16.mxu0 0
      %972 = vmatpush1.bf16.msra.mxu0 0
      %973 = vmatprep.mubr.bf16.mxu0 0
      %974 = vmatmul.mubr.bf16.gmra.mrb[0].mxu0 %v396
      %v975 = vpop.f32.mrb[0].mxu0
      %v976 = vadd.f32 0.0, %v975
      %v977 = vpop.f32.mrb[0].mxu0
      %v978 = vadd.f32 0.0, %v977
      %v979 = vpop.f32.mrb[0].mxu0
      %v980 = vpop.f32.mrb[0].mxu0
      %981 = vdwg.mxu0
      %v982 = vadd.f32 %v976, %v378
      %v983 = vadd.f32 %v978, %v378
      %v984 = vmax.f32 %v982, 0.0
      %v985 = vmax.f32 %v983, 0.0
      %986 = vst [vmem:[%s259] sm:$0xff] %v744
      %987 = vst [vmem:[%s259 + $0x8] sm:$0xff] %v745
      %988 = vst [vmem:[%s259 + $0x10] sm:$0xff] %v746
      %989 = vst [vmem:[%s259 + $0x18] sm:$0xff] %v747
      %s990 = scalar_lea.vmem %s259, 32
      %991 = vst [vmem:[%s990] sm:$0xff] %v876
      %992 = vst [vmem:[%s990 + $0x8] sm:$0xff] %v877
      %993 = vst [vmem:[%s990 + $0x10] sm:$0xff] %v878
      %994 = vst [vmem:[%s990 + $0x18] sm:$0xff] %v879
      %995 = vst [vmem:[%s264] sm:$0xff] %v367
      %996 = vst [vmem:[%s264 + $0x8] sm:$0xff] %v368
      %997 = vst [vmem:[%s264 + $0x10] sm:$0xff] %v984
      %998 = vst [vmem:[%s264 + $0x18] sm:$0xff] %v985
      %s999 = scalar_lea.vmem %s264, 32
      %1000 = vst [vmem:[%s999] sm:$0xff] %v447
      %1001 = vst [vmem:[%s999 + $0x8] sm:$0xff] %v448
      %1002 = vst [vmem:[%s999 + $0x10] sm:$0xff] %v931
      %1003 = vst [vmem:[%s999 + $0x18] sm:$0xff] %v932
      %p1004 = scmp.lt.s32.totalorder %s18, 1
      %s1005 = scalar_select %p1004, %s18, 1
      %s1006 = smul.addr %s1005, 8
      %s1007 = smul.addr %s1006, 8
      %s1008 = scalar_lea.vmem %s5, %s1007
      %p1009 = scmp.lt.s32.totalorder %s18, 1
      %s1010 = scalar_select %p1009, %s18, 1
      %s1011 = smul.addr %s1010, 8
      %s1012 = smul.addr %s1011, 8
      %s1013 = scalar_lea.vmem %s6, %s1012
      // Predicated region
      $region41: #{trans_net_forward.1} parent=39 // pred_check
        %p1014 = pneg %p146
      $region42: #{trans_net_forward.1} parent=39 // pred_check_branch
        %1016 = sbr.rel (%p1014) target = $region44
      $region43: #{trans_net_forward.1} parent=39 // pred_region
        _
      $region44: #{trans_net_forward.1} parent=39 // pred_fallthru
        _
      // Predicated region
      $region45: #{trans_net_forward.1} parent=39 // pred_check
        %p1017 = pneg %p172
      $region46: #{trans_net_forward.1} parent=39 // pred_check_branch
        %1019 = sbr.rel (%p1017) target = $region48
      $region47: #{trans_net_forward.1} parent=39 // pred_region
        _
      $region48: #{trans_net_forward.1} parent=39 // pred_fallthru
        _
    $region40: #{trans_net_forward.1} parent=5 // pred_fallthru
      _
    %p1020 = scmp.le.s32.totalorder 2, %s13
    // Predicated region
    $region49: #{trans_net_forward.1} parent=5 // pred_check
      %p1021 = pneg %p1020
    $region50: #{trans_net_forward.1} parent=5 // pred_check_branch
      %1023 = sbr.rel (%p1021) target = $region52
    $region51: #{trans_net_forward.1} parent=5 // pred_region
      %s1024 = ssub.s32 %s13, 2
      // Predicated region
      $region53: #{trans_net_forward.1} parent=51 // pred_check
        %p1025 = pneg %p152
      $region54: #{trans_net_forward.1} parent=51 // pred_check_branch
        %1027 = sbr.rel (%p1025) target = $region56
      $region55: #{trans_net_forward.1} parent=51 // pred_region
        %p1028 = scmp.lt.s32.totalorder %s19, 1
        %s1029 = scalar_select %p1028, %s19, 1
        %s1030 = smul.addr %s1029, 8
        %s1031 = smul.addr %s1030, 8
        %s1032 = scalar_lea.vmem %s5, %s1031
      $region56: #{trans_net_forward.1} parent=51 // pred_fallthru
        _
      // Predicated region
      $region57: #{trans_net_forward.1} parent=51 // pred_check
        %p1033 = pneg %p178
      $region58: #{trans_net_forward.1} parent=51 // pred_check_branch
        %1035 = sbr.rel (%p1033) target = $region60
      $region59: #{trans_net_forward.1} parent=51 // pred_region
        %p1036 = scmp.lt.s32.totalorder %s19, 1
        %s1037 = scalar_select %p1036, %s19, 1
        %s1038 = smul.addr %s1037, 8
        %s1039 = smul.addr %s1038, 8
        %s1040 = scalar_lea.vmem %s6, %s1039
      $region60: #{trans_net_forward.1} parent=51 // pred_fallthru
        _
    $region52: #{trans_net_forward.1} parent=5 // pred_fallthru
      _
  $region6: #{trans_net_forward.1} parent=0 // loop_footer
    %s17 = sadd.s32 1, %s13
  $region7: #{trans_net_forward.1} parent=0 // loop_footer_branch
    %12 = sbr.rel target = $region3
  $region8: #{trans_net_forward.1} parent=0 // loop_exit
    _

</llo_original>
